<compile_context>
chip_gen: v5e
topology: v5e:2x2
jax: 0.10.0
libtpu: 0.0.40
codegen_flags: <defaults>
</compile_context>

<pallas_src>
import jax
import jax.numpy as jnp
from jax.experimental import pallas as pl
from jax.experimental.pallas import tpu as pltpu


def _cdiv(a, b):
    return (a + b - 1) // b


def _round_up(v, m):
    return _cdiv(v, m) * m


def _make_loss_kernel(b_true, tb, n_tiles, ragged):
    """b_true: true (unpadded) batch size; tb: rows per batch tile;
    ragged: whether any grid block can contain rows >= b_true."""

    def kernel(x_ref, w_ref, b_ref, t_ref, acc_ref):
        s = pl.program_id(0)          # split axis (parallel / core_parallel)
        i = pl.program_id(1)          # batch-tile (reduction) axis

        @pl.when(i == 0)
        def _init():
            acc_ref[...] = jnp.zeros_like(acc_ref)

        # f32 -> bf16 cast fused into the kernel: x is read from HBM exactly
        # once (4 B/elem) and the VPU cast hides under DMA/MXU slack.
        x_bf = x_ref[...].astype(jnp.bfloat16)

        # model_out = x @ W^T — bf16 operands on the MXU, f32 accumulation.
        # W stays in its native [D_out, D_in] layout (transposed-RHS contraction).
        y = jax.lax.dot_general(
            x_bf, w_ref[...],
            dimension_numbers=(((1,), (1,)), ((), ())),
            preferred_element_type=jnp.float32)
        d = (y + b_ref[...]) - t_ref[...]     # bias broadcast + residual, f32
        d2 = d * d
        dout = d2.shape[1]

        def _accumulate(v):
            # Fold (TB, D_out) into one (8, D_out) tile: the reshape only
            # splits the sublane-major dim, so this is pure element-wise vreg
            # adds (VPU) and the accumulator store stays lane-dense.
            acc_ref[...] += v.reshape(tb // 8, 8, dout).sum(axis=0)

        if ragged:
            blk = s * n_tiles + i
            row_start = blk * tb
            on_boundary = row_start + tb > b_true

            # Mask only on the boundary tile — rows past b_true hold undefined
            # data (no wrapper pad) and must be zeroed before accumulation.
            @pl.when(on_boundary)
            def _masked():
                row = row_start + jax.lax.broadcasted_iota(jnp.int32, (tb, 1), 0)
                _accumulate(jnp.where(row < b_true, d2, 0.0))

            @pl.when(jnp.logical_not(on_boundary))
            def _full():
                _accumulate(d2)
        else:
            _accumulate(d2)

    return kernel


def loss_wrapper_forward(x, weight, bias, targets, *, block_b=1024,
                         num_splits=1, split_semantics="parallel"):
    """x: [B, D_in] f32, weight: [D_out, D_in] (PyTorch Linear layout),
    bias: [D_out], targets: [B, D_out]. Returns scalar MSE loss (mean).

    num_splits / split_semantics:
      * v5e / v6e (single TensorCore): leave num_splits=1 (default); a split
        axis is only a serial loop with per-step overhead.
      * v7x (2 TCs): pass num_splits=2, split_semantics=pltpu.CORE_PARALLEL so
        each core streams half the batch (plain "parallel" may leave TC1 idle).
    """
    B, d_in = x.shape
    d_out = weight.shape[0]
    assert weight.shape == (d_out, d_in)
    assert targets.shape == (B, d_out)
    # lane-aligned feature dims keep MXU / vregs dense
    assert d_in % 128 == 0 and d_out % 128 == 0, "D_in/D_out must be multiples of 128"

    # One-time, tiny operand prep: weight -> bf16, bias -> (1, D_out) f32.
    # x and targets are NOT cast or padded in the wrapper (each of those would
    # be a full extra HBM round-trip on a bandwidth-bound kernel).
    w_bf = weight.astype(jnp.bfloat16)                 # native [D_out, D_in]
    b2 = bias.reshape(1, d_out).astype(jnp.float32)
    t32 = targets.astype(jnp.float32)                  # no-op when already f32

    # ---- tiling / VMEM budget -------------------------------------------
    rows_per_split = _cdiv(B, num_splits)
    tb = min(block_b, _round_up(rows_per_split, 16))
    tb = max(16, (tb // 16) * 16)

    weight_bytes = d_out * d_in * 2
    # Single-buffer the resident weight/bias only when it is big enough to
    # matter (halves its VMEM footprint for large Linear layers, which is what
    # keeps this strategy alive under v7x's 64 MiB VMEM / 32 MiB scoped default).
    single_buffer_resident = weight_bytes >= (4 << 20)
    resident_mode = pl.Buffered(1) if single_buffer_resident else None
    w_buffers = 1 if single_buffer_resident else 2
    resident_bytes = (w_buffers * weight_bytes          # weight
                      + w_buffers * d_out * 4           # bias
                      + 2 * 8 * d_out * 4)              # (8, D_out) partials
    stream_bytes_per_row = 2 * (d_in * 4 + d_out * 4)   # x + targets, dbl-buffered
    vmem_budget = 24 << 20                               # headroom under 32 MiB
    if resident_bytes < vmem_budget:
        tb_cap = (vmem_budget - resident_bytes) // stream_bytes_per_row
        tb_cap = max(16, (tb_cap // 16) * 16)
        tb = min(tb, tb_cap)
    # TODO(synk): if the resident weight alone exceeds the VMEM budget, add a
    # K (D_in) tiling axis with MXU accumulation instead of keeping W resident.

    n_tiles = _cdiv(rows_per_split, tb)
    n_blocks = _cdiv(B, tb)                  # blocks that contain real rows
    total_blocks = num_splits * n_tiles
    ragged = total_blocks * tb != B          # some block touches rows >= B

    if total_blocks > n_blocks:
        # Extra (fully out-of-range) blocks re-read the last valid block and
        # are fully masked in-kernel; clamping keeps every DMA in bounds.
        def batch_block(s, i):
            return jnp.minimum(s * n_tiles + i, n_blocks - 1)
    else:
        def batch_block(s, i):
            return s * n_tiles + i

    def _resident_spec(shape):
        if resident_mode is not None:
            return pl.BlockSpec(shape, lambda s, i: (0, 0),
                                pipeline_mode=resident_mode)
        return pl.BlockSpec(shape, lambda s, i: (0, 0))

    kernel = _make_loss_kernel(B, tb, n_tiles, ragged)

    partials = pl.pallas_call(
        kernel,
        out_shape=jax.ShapeDtypeStruct((num_splits * 8, d_out), jnp.float32),
        grid_spec=pltpu.PrefetchScalarGridSpec(
            num_scalar_prefetch=0,
            grid=(num_splits, n_tiles),
            in_specs=[
                # x: streamed per batch tile as f32 (cast to bf16 in-kernel)
                pl.BlockSpec((tb, d_in), lambda s, i: (batch_block(s, i), 0)),
                # weight: resident (constant index_map -> DMA'd once)
                _resident_spec((d_out, d_in)),
                # bias: resident
                _resident_spec((1, d_out)),
                # targets: streamed per batch tile, f32
                pl.BlockSpec((tb, d_out), lambda s, i: (batch_block(s, i), 0)),
            ],
            # one lane-dense (8, D_out) partial-sum block per split
            out_specs=pl.BlockSpec((8, d_out), lambda s, i: (s, 0)),
        ),
        compiler_params=pltpu.CompilerParams(
            # split axis: "parallel" (harmless at size 1) or CORE_PARALLEL on
            # v7x; batch-tile axis carries the accumulator -> arbitrary
            dimension_semantics=(split_semantics, "arbitrary"),
            vmem_limit_bytes=32 * 1024 * 1024,
        ),
    )(x, w_bf, b2, t32)

    # MSELoss(reduction='mean'): divide by the TRUE element count.
    # (f32 partial sums; for B*D_out >> 1e8 consider per-split rescaling.)
    return jnp.sum(partials) / (B * d_out)


if __name__ == "__main__":
    # shapes implied by nn.Linear(D_IN, D_OUT) + MSELoss; lane-aligned features,
    # batch deliberately NOT a multiple of the tile to exercise the ragged path
    B, D_IN, D_OUT = 500, 256, 128

    key = jax.random.PRNGKey(0)
    kx, kt, kw, kb = jax.random.split(key, 4)

    weight = jax.random.normal(kw, (D_OUT, D_IN), jnp.float32) * 0.1
    bias = jax.random.normal(kb, (D_OUT,), jnp.float32) * 0.1
    x = jax.random.normal(kx, (B, D_IN), jnp.float32)
    targets = jax.random.normal(kt, (B, D_OUT), jnp.float32)

    loss = loss_wrapper_forward(x, weight, bias, targets)
    jax.block_until_ready(loss)

    # reference with the same bf16 matmul operands / f32 accumulation
    y_ref = jax.lax.dot_general(
        x.astype(jnp.bfloat16), weight.astype(jnp.bfloat16),
        dimension_numbers=(((1,), (1,)), ((), ())),
        preferred_element_type=jnp.float32) + bias
    ref_bf16 = jnp.mean((y_ref - targets) ** 2)
    assert jnp.allclose(loss, ref_bf16, rtol=2e-3, atol=1e-5), (loss, ref_bf16)

    # loose check against the pure-f32 PyTorch-equivalent math
    ref_f32 = jnp.mean((x @ weight.T + bias - targets) ** 2)
    assert jnp.allclose(loss, ref_f32, rtol=5e-2, atol=1e-3), (loss, ref_f32)

    print("KERNEL_OK")
</pallas_src>

<mosaic_0001>
module attributes {stable_mosaic.version = 11 : i64} {
  func.func @kernel(%arg0: i32, %arg1: i32, %arg2: memref<512x256xf32, #tpu.memory_space<vmem>>, %arg3: memref<128x256xbf16, #tpu.memory_space<vmem>>, %arg4: memref<1x128xf32, #tpu.memory_space<vmem>>, %arg5: memref<512x128xf32, #tpu.memory_space<vmem>>, %arg6: memref<8x128xf32, #tpu.memory_space<vmem>>) attributes {dimension_semantics = [#tpu.dimension_semantics<parallel>, #tpu.dimension_semantics<arbitrary>], iteration_bounds = array<i64: 1, 1>, scalar_prefetch = 0 : i64, scratch_operands = 0 : i64, tpu.core_type = #tpu.core_type<tc>, window_params = [{transform_indices = @transform_0, window_bounds = array<i64: 512, 256>}, {pipeline_mode = #tpu.pipeline_mode<synchronous>, transform_indices = @transform_1, window_bounds = array<i64: 128, 256>}, {pipeline_mode = #tpu.pipeline_mode<synchronous>, transform_indices = @transform_2, window_bounds = array<i64: 1, 128>}, {transform_indices = @transform_3, window_bounds = array<i64: 512, 128>}, {transform_indices = @transform_4, window_bounds = array<i64: 8, 128>}]} {
    %c0_i32 = arith.constant 0 : i32
    %0 = arith.cmpi eq, %arg1, %c0_i32 : i32
    %1 = arith.extui %0 : i1 to i32
    %c0_i32_0 = arith.constant 0 : i32
    %2 = arith.cmpi ne, %1, %c0_i32_0 : i32
    scf.if %2 {
      %cst_11 = arith.constant 0.000000e+00 : f32
      %23 = vector.broadcast %cst_11 : f32 to vector<8x128xf32>
      %c0_12 = arith.constant 0 : index
      %c0_13 = arith.constant 0 : index
      %24 = vector.load %arg6[%c0_12, %c0_13] : memref<8x128xf32, #tpu.memory_space<vmem>>, vector<8x128xf32>
      tpu.vector_store %arg6[%c0_12, %c0_13], %23 {strides = array<i32>} : memref<8x128xf32, #tpu.memory_space<vmem>>, vector<8x128xf32>,
    } else {
    }
    %c0 = arith.constant 0 : index
    %c0_1 = arith.constant 0 : index
    %3 = vector.load %arg2[%c0, %c0_1] : memref<512x256xf32, #tpu.memory_space<vmem>>, vector<512x256xf32>
    %4 = arith.truncf %3 : vector<512x256xf32> to vector<512x256xbf16>
    %c0_2 = arith.constant 0 : index
    %c0_3 = arith.constant 0 : index
    %5 = vector.load %arg3[%c0_2, %c0_3] : memref<128x256xbf16, #tpu.memory_space<vmem>>, vector<128x256xbf16>
    %cst = arith.constant dense<0.000000e+00> : vector<512x128xf32>
    %6 = tpu.matmul %4, %5, %cst {dimension_numbers = #tpu.dot_dimension_numbers<[1], [1], [0], [0], [0, 0, 1, 0], [], []>} : vector<512x256xbf16>, vector<128x256xbf16>, vector<512x128xf32> -> vector<512x128xf32>
    %c0_4 = arith.constant 0 : index
    %c0_5 = arith.constant 0 : index
    %7 = vector.load %arg4[%c0_4, %c0_5] : memref<1x128xf32, #tpu.memory_space<vmem>>, vector<1x128xf32>
    %8 = vector.broadcast %7 : vector<1x128xf32> to vector<512x128xf32>
    %9 = arith.addf %6, %8 : vector<512x128xf32>
    %c0_6 = arith.constant 0 : index
    %c0_7 = arith.constant 0 : index
    %10 = vector.load %arg5[%c0_6, %c0_7] : memref<512x128xf32, #tpu.memory_space<vmem>>, vector<512x128xf32>
    %11 = arith.subf %9, %10 : vector<512x128xf32>
    %12 = arith.mulf %11, %11 : vector<512x128xf32>
    %c1_i32 = arith.constant 1 : i32
    %13 = arith.muli %arg0, %c1_i32 : i32
    %14 = arith.addi %13, %arg1 : i32
    %c512_i32 = arith.constant 512 : i32
    %15 = arith.muli %14, %c512_i32 : i32
    %c512_i32_8 = arith.constant 512 : i32
    %16 = arith.addi %15, %c512_i32_8 : i32
    %c500_i32 = arith.constant 500 : i32
    %17 = arith.cmpi sgt, %16, %c500_i32 : i32
    %18 = arith.extui %17 : i1 to i32
    %c0_i32_9 = arith.constant 0 : i32
    %19 = arith.cmpi ne, %18, %c0_i32_9 : i32
    scf.if %19 {
      %23 = tpu.iota {dimensions = array<i32: 0>} : vector<512x1xi32>
      %24 = vector.broadcast %15 : i32 to vector<512x1xi32>
      %25 = arith.addi %24, %23 : vector<512x1xi32>
      %c500_i32_11 = arith.constant 500 : i32
      %26 = vector.broadcast %c500_i32_11 : i32 to vector<512x1xi32>
      %27 = arith.cmpi slt, %25, %26 : vector<512x1xi32>
      %cst_12 = arith.constant 0.000000e+00 : f32
      %28 = vector.shape_cast %27 : vector<512x1xi1> to vector<512x1xi1>
      %29 = vector.broadcast %28 : vector<512x1xi1> to vector<512x128xi1>
      %30 = vector.broadcast %cst_12 : f32 to vector<512x128xf32>
      %31 = arith.select %29, %12, %30 : vector<512x128xi1>, vector<512x128xf32>
      %c0_13 = arith.constant 0 : index
      %c0_14 = arith.constant 0 : index
      %32 = vector.load %arg6[%c0_13, %c0_14] : memref<8x128xf32, #tpu.memory_space<vmem>>, vector<8x128xf32>
      %33 = vector.shape_cast %31 : vector<512x128xf32> to vector<64x8x128xf32>
      %cst_15 = arith.constant dense<0.000000e+00> : vector<8x128xf32>
      %34 = vector.multi_reduction <add>, %33, %cst_15 [0] : vector<64x8x128xf32> to vector<8x128xf32>
      %35 = arith.addf %32, %34 : vector<8x128xf32>
      %c0_16 = arith.constant 0 : index
      %c0_17 = arith.constant 0 : index
      %36 = vector.load %arg6[%c0_16, %c0_17] : memref<8x128xf32, #tpu.memory_space<vmem>>, vector<8x128xf32>
      tpu.vector_store %arg6[%c0_16, %c0_17], %35 {strides = array<i32>} : memref<8x128xf32, #tpu.memory_space<vmem>>, vector<8x128xf32>,
    } else {
    }
    %true = arith.constant true
    %20 = arith.xori %17, %true : i1
    %21 = arith.extui %20 : i1 to i32
    %c0_i32_10 = arith.constant 0 : i32
    %22 = arith.cmpi ne, %21, %c0_i32_10 : i32
    scf.if %22 {
      %c0_11 = arith.constant 0 : index
      %c0_12 = arith.constant 0 : index
      %23 = vector.load %arg6[%c0_11, %c0_12] : memref<8x128xf32, #tpu.memory_space<vmem>>, vector<8x128xf32>
      %24 = vector.shape_cast %12 : vector<512x128xf32> to vector<64x8x128xf32>
      %cst_13 = arith.constant dense<0.000000e+00> : vector<8x128xf32>
      %25 = vector.multi_reduction <add>, %24, %cst_13 [0] : vector<64x8x128xf32> to vector<8x128xf32>
      %26 = arith.addf %23, %25 : vector<8x128xf32>
      %c0_14 = arith.constant 0 : index
      %c0_15 = arith.constant 0 : index
      %27 = vector.load %arg6[%c0_14, %c0_15] : memref<8x128xf32, #tpu.memory_space<vmem>>, vector<8x128xf32>
      tpu.vector_store %arg6[%c0_14, %c0_15], %26 {strides = array<i32>} : memref<8x128xf32, #tpu.memory_space<vmem>>, vector<8x128xf32>,
    } else {
    }
    return
  }
  func.func @transform_0(%arg0: i32, %arg1: i32) -> (i32, i32) {
    %c1_i32 = arith.constant 1 : i32
    %0 = arith.muli %arg0, %c1_i32 : i32
    %1 = arith.addi %0, %arg1 : i32
    %c0_i32 = arith.constant 0 : i32
    %c0_i32_0 = arith.constant 0 : i32
    return %1, %c0_i32 : i32, i32
  }
  func.func @transform_1(%arg0: i32, %arg1: i32) -> (i32, i32) {
    %c0_i32 = arith.constant 0 : i32
    %c0_i32_0 = arith.constant 0 : i32
    %c0_i32_1 = arith.constant 0 : i32
    return %c0_i32, %c0_i32_0 : i32, i32
  }
  func.func @transform_2(%arg0: i32, %arg1: i32) -> (i32, i32) {
    %c0_i32 = arith.constant 0 : i32
    %c0_i32_0 = arith.constant 0 : i32
    %c0_i32_1 = arith.constant 0 : i32
    return %c0_i32, %c0_i32_0 : i32, i32
  }
  func.func @transform_3(%arg0: i32, %arg1: i32) -> (i32, i32) {
    %c1_i32 = arith.constant 1 : i32
    %0 = arith.muli %arg0, %c1_i32 : i32
    %1 = arith.addi %0, %arg1 : i32
    %c0_i32 = arith.constant 0 : i32
    %c0_i32_0 = arith.constant 0 : i32
    return %1, %c0_i32 : i32, i32
  }
  func.func @transform_4(%arg0: i32, %arg1: i32) -> (i32, i32) {
    %c0_i32 = arith.constant 0 : i32
    %c0_i32_0 = arith.constant 0 : i32
    return %arg0, %c0_i32 : i32, i32
  }
}

</mosaic_0001>

<llo_original>
// kernel: tpu_custom_call.1
$region0: #{tpu_custom_call.1}
  #allocation0 [shape = 'u32[]', space=smem, size = 0x4, offset = 0x4, fixed_abs, tag = 'smem constant byte address 0x4 - core index']
  #allocation1 [shape = 'u32[72,128]{1,0:T(1,128)}', space=vmem, size = 0x9000, scoped, tag = 'internal scratch']
  %s0 = inlined_call_operand.hbm [shape: f32[500,256], index: 0, kind: input, shape index: {}]
  %s1 = inlined_call_operand.hbm [shape: bf16[128,256], index: 1, kind: input, shape index: {}]
  %s2 = inlined_call_operand.vmem [shape: f32[1,128], index: 2, kind: input, shape index: {}]
  %s3 = inlined_call_operand.hbm [shape: f32[500,128], index: 3, kind: input, shape index: {}]
  %s4 = inlined_call_operand.hbm [shape: f32[8,128], index: 4, kind: output, shape index: {}]
  %s5 = sld [smem:[#allocation0]]
  $region50: #{tpu_custom_call.1} parent=0
    _
  %s7 = ssub.s32 1, %s5
  %s8 = scalar_select 0, %s7, %s5
  $region1: #{tpu_custom_call.1} parent=0
    #allocation2 [shape = 'u8[524288]{0}', space=vmem, size = 0x80000, scoped, tag = 'input window, operand 0, single buffered']
    #allocation3 [shape = 's32[1]{0}', space=sflag, size = 0x4, scoped, tag = 'scoped memory for tpu_custom_call.1']
    #allocation4 [shape = 's32[1]{0}', space=sflag, size = 0x4, scoped, tag = 'scoped memory for tpu_custom_call.1']
    #allocation5 [shape = 'u8[65536]{0}', space=vmem, size = 0x10000, scoped, tag = 'input window, operand 1, single buffered']
    #allocation6 [shape = 's32[1]{0}', space=sflag, size = 0x4, scoped, tag = 'scoped memory for tpu_custom_call.1']
    #allocation7 [shape = 'u8[262144]{0}', space=vmem, size = 0x40000, scoped, tag = 'input window, operand 3, single buffered']
    #allocation8 [shape = 'u8[4096]{0}', space=vmem, size = 0x1000, scoped, tag = 'output window, operand 0, single buffered']
    %9 = vsyncpa [#allocation3], 0
    %10 = vsyncpa [#allocation6], 0
    %11 = vsyncpa [#allocation4], 0
    // Predicated region
    $region2: #{tpu_custom_call.1} parent=1 // pred_check
      _
    $region3: #{tpu_custom_call.1} parent=1 // pred_check_branch
      %13 = sbr.rel (0) target = $region5
    $region4: #{tpu_custom_call.1} parent=1 // pred_region
      %s14 = sadd.s32 0, 0
      %s15 = smul.u32 64, %s14
      %s16 = ssub.s32 63, %s15
      %s17 = smul.u32 8, %s16
      %s18 = smul.u32 %s17, 2
      %s19 = ssub.s32 1024, %s18
      %s20 = sshll.u32 %s19, 4
      %21 = vsyncadd [#allocation3], %s20
      %p22 = scmp.ne.s32.totalorder 0, %s18
      %s23 = smul.addr %s15, 2
      %s24 = smul.addr %s23, 8
      %s25 = scalar_lea.hbm %s0, %s24
      %s26 = smul.u32 16, %s16
      %s27 = sshll.u32 %s25, 4
      %s28 = int_to_ptr.hbm [resolvable:$true] %s27
      %s29 = sshll.u32 [#allocation2], 4
      %s30 = int_to_ptr.vmem [resolvable:$true] %s29
      %s31 = sshll.u32 %s26, 4
      %35 = dma.hbm_to_vmem [thread:$0]  (%p22), %s28, %s31, %s30, [#allocation3], 256, 256, 16
    $region5: #{tpu_custom_call.1} parent=1 // pred_fallthru
      _
    // Predicated region
    $region6: #{tpu_custom_call.1} parent=1 // pred_check
      _
    $region7: #{tpu_custom_call.1} parent=1 // pred_check_branch
      %37 = sbr.rel (0) target = $region9
    $region8: #{tpu_custom_call.1} parent=1 // pred_region
      %39 = vsyncadd [#allocation6], 0
      %s40 = sshll.u32 %s1, 4
      %s41 = int_to_ptr.hbm [resolvable:$true] %s40
      %s42 = sshll.u32 [#allocation5], 4
      %s43 = int_to_ptr.vmem [resolvable:$true] %s42
      %48 = dma.hbm_to_vmem [thread:$0]  %s41, 2048, %s43, [#allocation6], 128, 128, 8
    $region9: #{tpu_custom_call.1} parent=1 // pred_fallthru
      _
    // Predicated region
    $region10: #{tpu_custom_call.1} parent=1 // pred_check
      _
    $region11: #{tpu_custom_call.1} parent=1 // pred_check_branch
      %50 = sbr.rel (0) target = $region13
    $region12: #{tpu_custom_call.1} parent=1 // pred_region
      _
    $region13: #{tpu_custom_call.1} parent=1 // pred_fallthru
      _
    // Predicated region
    $region14: #{tpu_custom_call.1} parent=1 // pred_check
      _
    $region15: #{tpu_custom_call.1} parent=1 // pred_check_branch
      %52 = sbr.rel (0) target = $region17
    $region16: #{tpu_custom_call.1} parent=1 // pred_region
      %s53 = sadd.s32 0, 0
      %s54 = smul.u32 64, %s53
      %s55 = ssub.s32 63, %s54
      %s56 = smul.u32 8, %s55
      %s57 = ssub.s32 512, %s56
      %s58 = sshll.u32 %s57, 4
      %59 = vsyncadd [#allocation6], %s58
      %p60 = scmp.ne.s32.totalorder 0, %s56
      %s61 = smul.addr %s54, 8
      %s62 = scalar_lea.hbm %s3, %s61
      %s63 = smul.u32 8, %s55
      %s64 = sshll.u32 %s62, 4
      %s65 = int_to_ptr.hbm [resolvable:$true] %s64
      %s66 = sshll.u32 [#allocation7], 4
      %s67 = int_to_ptr.vmem [resolvable:$true] %s66
      %s68 = sshll.u32 %s63, 4
      %72 = dma.hbm_to_vmem [thread:$0]  (%p60), %s65, %s68, %s67, [#allocation6], 128, 128, 8
    $region17: #{tpu_custom_call.1} parent=1 // pred_fallthru
      _
    // Predicated region
    $region18: #{tpu_custom_call.1} parent=1 // pred_check
      _
    $region19: #{tpu_custom_call.1} parent=1 // pred_check_branch
      %74 = sbr.rel (0) target = $region21
    $region20: #{tpu_custom_call.1} parent=1 // pred_region
      %76 = dma.done [#allocation3], 16384
    $region21: #{tpu_custom_call.1} parent=1 // pred_fallthru
      _
    // Predicated region
    $region22: #{tpu_custom_call.1} parent=1 // pred_check
      _
    $region23: #{tpu_custom_call.1} parent=1 // pred_check_branch
      %78 = sbr.rel (0) target = $region25
    $region24: #{tpu_custom_call.1} parent=1 // pred_region
      %80 = dma.done [#allocation6], 2048
    $region25: #{tpu_custom_call.1} parent=1 // pred_fallthru
      _
    // Predicated region
    $region26: #{tpu_custom_call.1} parent=1 // pred_check
      _
    $region27: #{tpu_custom_call.1} parent=1 // pred_check_branch
      %82 = sbr.rel (0) target = $region29
    $region28: #{tpu_custom_call.1} parent=1 // pred_region
      %84 = dma.done [#allocation6], 8192
    $region29: #{tpu_custom_call.1} parent=1 // pred_fallthru
      _
    %s85 = sadd.s32 0, 0
    %s86 = smul.u32 64, %s85
    %s87 = ssub.s32 63, %s86
    %s88 = smul.u32 8, %s87
    %s89 = smul.u32 %s88, 2
    %s90 = sadd.s32 0, 0
    %s91 = smul.u32 64, %s90
    %s92 = ssub.s32 63, %s91
    %s93 = smul.u32 8, %s92
    %p94 = scmp.eq.s32.totalorder 0, 0
    // Predicated region
    $region30: #{tpu_custom_call.1} parent=1 // pred_check
      %p95 = pneg %p94
    $region31: #{tpu_custom_call.1} parent=1 // pred_check_branch
      %97 = sbr.rel (%p95) target = $region33
    $region32: #{tpu_custom_call.1} parent=1 // pred_region
      %98 = vst [vmem:[#allocation8] sm:$0xff] 0.0
    $region33: #{tpu_custom_call.1} parent=1 // pred_fallthru
      _
    %v99 = vld [vmem:[#allocation2] sm:$0xff]
    %v100 = vld [vmem:[#allocation2 + $0x8] sm:$0xff]
    %v101 = vld [vmem:[#allocation2 + $0x10] sm:$0xff]
    %v102 = vld [vmem:[#allocation2 + $0x18] sm:$0xff]
    %v103 = vld [vmem:[#allocation2 + $0x20] sm:$0xff]
    %v104 = vld [vmem:[#allocation2 + $0x28] sm:$0xff]
    %v105 = vld [vmem:[#allocation2 + $0x30] sm:$0xff]
    %v106 = vld [vmem:[#allocation2 + $0x38] sm:$0xff]
    %v107 = vld [vmem:[#allocation2 + $0x40] sm:$0xff]
    %v108 = vld [vmem:[#allocation2 + $0x48] sm:$0xff]
    %v109 = vld [vmem:[#allocation2 + $0x50] sm:$0xff]
    %v110 = vld [vmem:[#allocation2 + $0x58] sm:$0xff]
    %v111 = vld [vmem:[#allocation2 + $0x60] sm:$0xff]
    %v112 = vld [vmem:[#allocation2 + $0x68] sm:$0xff]
    %v113 = vld [vmem:[#allocation2 + $0x70] sm:$0xff]
    %v114 = vld [vmem:[#allocation2 + $0x78] sm:$0xff]
    %v115 = vld [vmem:[#allocation2 + $0x80] sm:$0xff]
    %v116 = vld [vmem:[#allocation2 + $0x88] sm:$0xff]
    %v117 = vld [vmem:[#allocation2 + $0x90] sm:$0xff]
    %v118 = vld [vmem:[#allocation2 + $0x98] sm:$0xff]
    %v119 = vld [vmem:[#allocation2 + $0xa0] sm:$0xff]
    %v120 = vld [vmem:[#allocation2 + $0xa8] sm:$0xff]
    %v121 = vld [vmem:[#allocation2 + $0xb0] sm:$0xff]
    %v122 = vld [vmem:[#allocation2 + $0xb8] sm:$0xff]
    %v123 = vld [vmem:[#allocation2 + $0xc0] sm:$0xff]
    %v124 = vld [vmem:[#allocation2 + $0xc8] sm:$0xff]
    %v125 = vld [vmem:[#allocation2 + $0xd0] sm:$0xff]
    %v126 = vld [vmem:[#allocation2 + $0xd8] sm:$0xff]
    %v127 = vld [vmem:[#allocation2 + $0xe0] sm:$0xff]
    %v128 = vld [vmem:[#allocation2 + $0xe8] sm:$0xff]
    %v129 = vld [vmem:[#allocation2 + $0xf0] sm:$0xff]
    %v130 = vld [vmem:[#allocation2 + $0xf8] sm:$0xff]
    %v131 = vld [vmem:[#allocation2 + $0x100] sm:$0xff]
    %v132 = vld [vmem:[#allocation2 + $0x108] sm:$0xff]
    %v133 = vld [vmem:[#allocation2 + $0x110] sm:$0xff]
    %v134 = vld [vmem:[#allocation2 + $0x118] sm:$0xff]
    %v135 = vld [vmem:[#allocation2 + $0x120] sm:$0xff]
    %v136 = vld [vmem:[#allocation2 + $0x128] sm:$0xff]
    %v137 = vld [vmem:[#allocation2 + $0x130] sm:$0xff]
    %v138 = vld [vmem:[#allocation2 + $0x138] sm:$0xff]
    %v139 = vld [vmem:[#allocation2 + $0x140] sm:$0xff]
    %v140 = vld [vmem:[#allocation2 + $0x148] sm:$0xff]
    %v141 = vld [vmem:[#allocation2 + $0x150] sm:$0xff]
    %v142 = vld [vmem:[#allocation2 + $0x158] sm:$0xff]
    %v143 = vld [vmem:[#allocation2 + $0x160] sm:$0xff]
    %v144 = vld [vmem:[#allocation2 + $0x168] sm:$0xff]
    %v145 = vld [vmem:[#allocation2 + $0x170] sm:$0xff]
    %v146 = vld [vmem:[#allocation2 + $0x178] sm:$0xff]
    %v147 = vld [vmem:[#allocation2 + $0x180] sm:$0xff]
    %v148 = vld [vmem:[#allocation2 + $0x188] sm:$0xff]
    %v149 = vld [vmem:[#allocation2 + $0x190] sm:$0xff]
    %v150 = vld [vmem:[#allocation2 + $0x198] sm:$0xff]
    %v151 = vld [vmem:[#allocation2 + $0x1a0] sm:$0xff]
    %v152 = vld [vmem:[#allocation2 + $0x1a8] sm:$0xff]
    %v153 = vld [vmem:[#allocation2 + $0x1b0] sm:$0xff]
    %v154 = vld [vmem:[#allocation2 + $0x1b8] sm:$0xff]
    %v155 = vld [vmem:[#allocation2 + $0x1c0] sm:$0xff]
    %v156 = vld [vmem:[#allocation2 + $0x1c8] sm:$0xff]
    %v157 = vld [vmem:[#allocation2 + $0x1d0] sm:$0xff]
    %v158 = vld [vmem:[#allocation2 + $0x1d8] sm:$0xff]
    %v159 = vld [vmem:[#allocation2 + $0x1e0] sm:$0xff]
    %v160 = vld [vmem:[#allocation2 + $0x1e8] sm:$0xff]
    %v161 = vld [vmem:[#allocation2 + $0x1f0] sm:$0xff]
    %v162 = vld [vmem:[#allocation2 + $0x1f8] sm:$0xff]
    %v163 = vld [vmem:[#allocation2 + $0x200] sm:$0xff]
    %v164 = vld [vmem:[#allocation2 + $0x208] sm:$0xff]
    %v165 = vld [vmem:[#allocation2 + $0x210] sm:$0xff]
    %v166 = vld [vmem:[#allocation2 + $0x218] sm:$0xff]
    %v167 = vld [vmem:[#allocation2 + $0x220] sm:$0xff]
    %v168 = vld [vmem:[#allocation2 + $0x228] sm:$0xff]
    %v169 = vld [vmem:[#allocation2 + $0x230] sm:$0xff]
    %v170 = vld [vmem:[#allocation2 + $0x238] sm:$0xff]
    %v171 = vld [vmem:[#allocation2 + $0x240] sm:$0xff]
    %v172 = vld [vmem:[#allocation2 + $0x248] sm:$0xff]
    %v173 = vld [vmem:[#allocation2 + $0x250] sm:$0xff]
    %v174 = vld [vmem:[#allocation2 + $0x258] sm:$0xff]
    %v175 = vld [vmem:[#allocation2 + $0x260] sm:$0xff]
    %v176 = vld [vmem:[#allocation2 + $0x268] sm:$0xff]
    %v177 = vld [vmem:[#allocation2 + $0x270] sm:$0xff]
    %v178 = vld [vmem:[#allocation2 + $0x278] sm:$0xff]
    %v179 = vld [vmem:[#allocation2 + $0x280] sm:$0xff]
    %v180 = vld [vmem:[#allocation2 + $0x288] sm:$0xff]
    %v181 = vld [vmem:[#allocation2 + $0x290] sm:$0xff]
    %v182 = vld [vmem:[#allocation2 + $0x298] sm:$0xff]
    %v183 = vld [vmem:[#allocation2 + $0x2a0] sm:$0xff]
    %v184 = vld [vmem:[#allocation2 + $0x2a8] sm:$0xff]
    %v185 = vld [vmem:[#allocation2 + $0x2b0] sm:$0xff]
    %v186 = vld [vmem:[#allocation2 + $0x2b8] sm:$0xff]
    %v187 = vld [vmem:[#allocation2 + $0x2c0] sm:$0xff]
    %v188 = vld [vmem:[#allocation2 + $0x2c8] sm:$0xff]
    %v189 = vld [vmem:[#allocation2 + $0x2d0] sm:$0xff]
    %v190 = vld [vmem:[#allocation2 + $0x2d8] sm:$0xff]
    %v191 = vld [vmem:[#allocation2 + $0x2e0] sm:$0xff]
    %v192 = vld [vmem:[#allocation2 + $0x2e8] sm:$0xff]
    %v193 = vld [vmem:[#allocation2 + $0x2f0] sm:$0xff]
    %v194 = vld [vmem:[#allocation2 + $0x2f8] sm:$0xff]
    %v195 = vld [vmem:[#allocation2 + $0x300] sm:$0xff]
    %v196 = vld [vmem:[#allocation2 + $0x308] sm:$0xff]
    %v197 = vld [vmem:[#allocation2 + $0x310] sm:$0xff]
    %v198 = vld [vmem:[#allocation2 + $0x318] sm:$0xff]
    %v199 = vld [vmem:[#allocation2 + $0x320] sm:$0xff]
    %v200 = vld [vmem:[#allocation2 + $0x328] sm:$0xff]
    %v201 = vld [vmem:[#allocation2 + $0x330] sm:$0xff]
    %v202 = vld [vmem:[#allocation2 + $0x338] sm:$0xff]
    %v203 = vld [vmem:[#allocation2 + $0x340] sm:$0xff]
    %v204 = vld [vmem:[#allocation2 + $0x348] sm:$0xff]
    %v205 = vld [vmem:[#allocation2 + $0x350] sm:$0xff]
    %v206 = vld [vmem:[#allocation2 + $0x358] sm:$0xff]
    %v207 = vld [vmem:[#allocation2 + $0x360] sm:$0xff]
    %v208 = vld [vmem:[#allocation2 + $0x368] sm:$0xff]
    %v209 = vld [vmem:[#allocation2 + $0x370] sm:$0xff]
    %v210 = vld [vmem:[#allocation2 + $0x378] sm:$0xff]
    %v211 = vld [vmem:[#allocation2 + $0x380] sm:$0xff]
    %v212 = vld [vmem:[#allocation2 + $0x388] sm:$0xff]
    %v213 = vld [vmem:[#allocation2 + $0x390] sm:$0xff]
    %v214 = vld [vmem:[#allocation2 + $0x398] sm:$0xff]
    %v215 = vld [vmem:[#allocation2 + $0x3a0] sm:$0xff]
    %v216 = vld [vmem:[#allocation2 + $0x3a8] sm:$0xff]
    %v217 = vld [vmem:[#allocation2 + $0x3b0] sm:$0xff]
    %v218 = vld [vmem:[#allocation2 + $0x3b8] sm:$0xff]
    %v219 = vld [vmem:[#allocation2 + $0x3c0] sm:$0xff]
    %v220 = vld [vmem:[#allocation2 + $0x3c8] sm:$0xff]
    %v221 = vld [vmem:[#allocation2 + $0x3d0] sm:$0xff]
    %v222 = vld [vmem:[#allocation2 + $0x3d8] sm:$0xff]
    %v223 = vld [vmem:[#allocation2 + $0x3e0] sm:$0xff]
    %v224 = vld [vmem:[#allocation2 + $0x3e8] sm:$0xff]
    %v225 = vld [vmem:[#allocation2 + $0x3f0] sm:$0xff]
    %v226 = vld [vmem:[#allocation2 + $0x3f8] sm:$0xff]
    %v227 = vpack.c.bf16 %v101, %v99
    %v228 = vpack.c.bf16 %v102, %v100
    %v229 = vpack.c.bf16 %v105, %v103
    %v230 = vpack.c.bf16 %v106, %v104
    %v231 = vpack.c.bf16 %v109, %v107
    %v232 = vpack.c.bf16 %v110, %v108
    %v233 = vpack.c.bf16 %v113, %v111
    %v234 = vpack.c.bf16 %v114, %v112
    %v235 = vpack.c.bf16 %v117, %v115
    %v236 = vpack.c.bf16 %v118, %v116
    %v237 = vpack.c.bf16 %v121, %v119
    %v238 = vpack.c.bf16 %v122, %v120
    %v239 = vpack.c.bf16 %v125, %v123
    %v240 = vpack.c.bf16 %v126, %v124
    %v241 = vpack.c.bf16 %v129, %v127
    %v242 = vpack.c.bf16 %v130, %v128
    %v243 = vpack.c.bf16 %v133, %v131
    %v244 = vpack.c.bf16 %v134, %v132
    %v245 = vpack.c.bf16 %v137, %v135
    %v246 = vpack.c.bf16 %v138, %v136
    %v247 = vpack.c.bf16 %v141, %v139
    %v248 = vpack.c.bf16 %v142, %v140
    %v249 = vpack.c.bf16 %v145, %v143
    %v250 = vpack.c.bf16 %v146, %v144
    %v251 = vpack.c.bf16 %v149, %v147
    %v252 = vpack.c.bf16 %v150, %v148
    %v253 = vpack.c.bf16 %v153, %v151
    %v254 = vpack.c.bf16 %v154, %v152
    %v255 = vpack.c.bf16 %v157, %v155
    %v256 = vpack.c.bf16 %v158, %v156
    %v257 = vpack.c.bf16 %v161, %v159
    %v258 = vpack.c.bf16 %v162, %v160
    %v259 = vpack.c.bf16 %v165, %v163
    %v260 = vpack.c.bf16 %v166, %v164
    %v261 = vpack.c.bf16 %v169, %v167
    %v262 = vpack.c.bf16 %v170, %v168
    %v263 = vpack.c.bf16 %v173, %v171
    %v264 = vpack.c.bf16 %v174, %v172
    %v265 = vpack.c.bf16 %v177, %v175
    %v266 = vpack.c.bf16 %v178, %v176
    %v267 = vpack.c.bf16 %v181, %v179
    %v268 = vpack.c.bf16 %v182, %v180
    %v269 = vpack.c.bf16 %v185, %v183
    %v270 = vpack.c.bf16 %v186, %v184
    %v271 = vpack.c.bf16 %v189, %v187
    %v272 = vpack.c.bf16 %v190, %v188
    %v273 = vpack.c.bf16 %v193, %v191
    %v274 = vpack.c.bf16 %v194, %v192
    %v275 = vpack.c.bf16 %v197, %v195
    %v276 = vpack.c.bf16 %v198, %v196
    %v277 = vpack.c.bf16 %v201, %v199
    %v278 = vpack.c.bf16 %v202, %v200
    %v279 = vpack.c.bf16 %v205, %v203
    %v280 = vpack.c.bf16 %v206, %v204
    %v281 = vpack.c.bf16 %v209, %v207
    %v282 = vpack.c.bf16 %v210, %v208
    %v283 = vpack.c.bf16 %v213, %v211
    %v284 = vpack.c.bf16 %v214, %v212
    %v285 = vpack.c.bf16 %v217, %v215
    %v286 = vpack.c.bf16 %v218, %v216
    %v287 = vpack.c.bf16 %v221, %v219
    %v288 = vpack.c.bf16 %v222, %v220
    %v289 = vpack.c.bf16 %v225, %v223
    %v290 = vpack.c.bf16 %v226, %v224
    %v291 = vld [vmem:[#allocation5] sm:$0xff]
    %v292 = vld [vmem:[#allocation5 + $0x8] sm:$0xff]
    %v293 = vld [vmem:[#allocation5 + $0x10] sm:$0xff]
    %v294 = vld [vmem:[#allocation5 + $0x18] sm:$0xff]
    %v295 = vld [vmem:[#allocation5 + $0x20] sm:$0xff]
    %v296 = vld [vmem:[#allocation5 + $0x28] sm:$0xff]
    %v297 = vld [vmem:[#allocation5 + $0x30] sm:$0xff]
    %v298 = vld [vmem:[#allocation5 + $0x38] sm:$0xff]
    %v299 = vld [vmem:[#allocation5 + $0x40] sm:$0xff]
    %v300 = vld [vmem:[#allocation5 + $0x48] sm:$0xff]
    %v301 = vld [vmem:[#allocation5 + $0x50] sm:$0xff]
    %v302 = vld [vmem:[#allocation5 + $0x58] sm:$0xff]
    %v303 = vld [vmem:[#allocation5 + $0x60] sm:$0xff]
    %v304 = vld [vmem:[#allocation5 + $0x68] sm:$0xff]
    %v305 = vld [vmem:[#allocation5 + $0x70] sm:$0xff]
    %v306 = vld [vmem:[#allocation5 + $0x78] sm:$0xff]
    %v307 = vld [vmem:[%s2] sm:$0x1]
    %v309 = vperm.slane %v307, 0
    %v327 = vunpack.c.l.b16 %v291
    %v328 = vunpack.c.h.b16 %v291
    %v329 = vunpack.c.l.b16 %v292
    %v330 = vunpack.c.h.b16 %v292
    %v331 = vunpack.c.l.b16 %v293
    %v332 = vunpack.c.h.b16 %v293
    %v333 = vunpack.c.l.b16 %v294
    %v334 = vunpack.c.h.b16 %v294
    %v335 = vunpack.c.l.b16 %v295
    %v336 = vunpack.c.h.b16 %v295
    %v337 = vunpack.c.l.b16 %v296
    %v338 = vunpack.c.h.b16 %v296
    %v339 = vunpack.c.l.b16 %v297
    %v340 = vunpack.c.h.b16 %v297
    %v341 = vunpack.c.l.b16 %v298
    %v342 = vunpack.c.h.b16 %v298
    %v343 = vunpack.c.l.b16 %v299
    %v344 = vunpack.c.h.b16 %v299
    %v345 = vunpack.c.l.b16 %v300
    %v346 = vunpack.c.h.b16 %v300
    %v347 = vunpack.c.l.b16 %v301
    %v348 = vunpack.c.h.b16 %v301
    %v349 = vunpack.c.l.b16 %v302
    %v350 = vunpack.c.h.b16 %v302
    %v351 = vunpack.c.l.b16 %v303
    %v352 = vunpack.c.h.b16 %v303
    %v353 = vunpack.c.l.b16 %v304
    %v354 = vunpack.c.h.b16 %v304
    %v355 = vunpack.c.l.b16 %v305
    %v356 = vunpack.c.h.b16 %v305
    %v357 = vunpack.c.l.b16 %v306
    %v358 = vunpack.c.h.b16 %v306
    %v359 = vpack.c.b16 %v329, %v327
    %v360 = vpack.c.b16 %v330, %v328
    %v361 = vpack.c.b16 %v333, %v331
    %v362 = vpack.c.b16 %v334, %v332
    %v363 = vpack.c.b16 %v337, %v335
    %v364 = vpack.c.b16 %v338, %v336
    %v365 = vpack.c.b16 %v341, %v339
    %v366 = vpack.c.b16 %v342, %v340
    %v367 = vpack.c.b16 %v345, %v343
    %v368 = vpack.c.b16 %v346, %v344
    %v369 = vpack.c.b16 %v349, %v347
    %v370 = vpack.c.b16 %v350, %v348
    %v371 = vpack.c.b16 %v353, %v351
    %v372 = vpack.c.b16 %v354, %v352
    %v373 = vpack.c.b16 %v357, %v355
    %v374 = vpack.c.b16 %v358, %v356
    %391 = vmatpush.bf16.xpose.msra.mxu0 %v373
    %392 = vmatpush.bf16.xpose.msra.mxu0 %v371
    %393 = vmatpush.bf16.xpose.msra.mxu0 %v369
    %394 = vmatpush.bf16.xpose.msra.mxu0 %v367
    %395 = vmatpush.bf16.xpose.msra.mxu0 %v365
    %396 = vmatpush.bf16.xpose.msra.mxu0 %v363
    %397 = vmatpush.bf16.xpose.msra.mxu0 %v361
    %398 = vmatpush.bf16.xpose.msra.mxu0 %v359
    %399 = vmatmul.bf16.gmra.mxu0 %v227
    %v400 = vpop.f32.mrf.mxu0
    %v401 = vadd.f32 %v309, %v400
    %v402 = vpop.f32.mrf.mxu0
    %v403 = vadd.f32 %v309, %v402
    %404 = vmatmul.bf16.gmra.mxu0 %v229
    %v405 = vpop.f32.mrf.mxu0
    %v406 = vadd.f32 %v309, %v405
    %v407 = vpop.f32.mrf.mxu0
    %v408 = vadd.f32 %v309, %v407
    %409 = vmatmul.bf16.gmra.mxu0 %v231
    %v410 = vpop.f32.mrf.mxu0
    %v411 = vadd.f32 %v309, %v410
    %v412 = vpop.f32.mrf.mxu0
    %v413 = vadd.f32 %v309, %v412
    %414 = vmatmul.bf16.gmra.mxu0 %v233
    %v415 = vpop.f32.mrf.mxu0
    %v416 = vadd.f32 %v309, %v415
    %v417 = vpop.f32.mrf.mxu0
    %v418 = vadd.f32 %v309, %v417
    %419 = vmatmul.bf16.gmra.mxu0 %v235
    %v420 = vpop.f32.mrf.mxu0
    %v421 = vadd.f32 %v309, %v420
    %v422 = vpop.f32.mrf.mxu0
    %v423 = vadd.f32 %v309, %v422
    %424 = vmatmul.bf16.gmra.mxu0 %v237
    %v425 = vpop.f32.mrf.mxu0
    %v426 = vadd.f32 %v309, %v425
    %v427 = vpop.f32.mrf.mxu0
    %v428 = vadd.f32 %v309, %v427
    %429 = vmatmul.bf16.gmra.mxu0 %v239
    %v430 = vpop.f32.mrf.mxu0
    %v431 = vadd.f32 %v309, %v430
    %v432 = vpop.f32.mrf.mxu0
    %v433 = vadd.f32 %v309, %v432
    %434 = vmatmul.bf16.gmra.mxu0 %v241
    %v435 = vpop.f32.mrf.mxu0
    %v436 = vadd.f32 %v309, %v435
    %v437 = vpop.f32.mrf.mxu0
    %v438 = vadd.f32 %v309, %v437
    %439 = vmatmul.bf16.gmra.mxu0 %v243
    %v440 = vpop.f32.mrf.mxu0
    %v441 = vadd.f32 %v309, %v440
    %v442 = vpop.f32.mrf.mxu0
    %v443 = vadd.f32 %v309, %v442
    %444 = vmatmul.bf16.gmra.mxu0 %v245
    %v445 = vpop.f32.mrf.mxu0
    %v446 = vadd.f32 %v309, %v445
    %v447 = vpop.f32.mrf.mxu0
    %v448 = vadd.f32 %v309, %v447
    %449 = vmatmul.bf16.gmra.mxu0 %v247
    %v450 = vpop.f32.mrf.mxu0
    %v451 = vadd.f32 %v309, %v450
    %v452 = vpop.f32.mrf.mxu0
    %v453 = vadd.f32 %v309, %v452
    %454 = vmatmul.bf16.gmra.mxu0 %v249
    %v455 = vpop.f32.mrf.mxu0
    %v456 = vadd.f32 %v309, %v455
    %v457 = vpop.f32.mrf.mxu0
    %v458 = vadd.f32 %v309, %v457
    %459 = vmatmul.bf16.gmra.mxu0 %v251
    %v460 = vpop.f32.mrf.mxu0
    %v461 = vadd.f32 %v309, %v460
    %v462 = vpop.f32.mrf.mxu0
    %v463 = vadd.f32 %v309, %v462
    %464 = vmatmul.bf16.gmra.mxu0 %v253
    %v465 = vpop.f32.mrf.mxu0
    %v466 = vadd.f32 %v309, %v465
    %v467 = vpop.f32.mrf.mxu0
    %v468 = vadd.f32 %v309, %v467
    %469 = vmatmul.bf16.gmra.mxu0 %v255
    %v470 = vpop.f32.mrf.mxu0
    %v471 = vadd.f32 %v309, %v470
    %v472 = vpop.f32.mrf.mxu0
    %v473 = vadd.f32 %v309, %v472
    %474 = vmatmul.bf16.gmra.mxu0 %v257
    %v475 = vpop.f32.mrf.mxu0
    %v476 = vadd.f32 %v309, %v475
    %v477 = vpop.f32.mrf.mxu0
    %v478 = vadd.f32 %v309, %v477
    %479 = vmatmul.bf16.gmra.mxu0 %v259
    %v480 = vpop.f32.mrf.mxu0
    %v481 = vadd.f32 %v309, %v480
    %v482 = vpop.f32.mrf.mxu0
    %v483 = vadd.f32 %v309, %v482
    %484 = vmatmul.bf16.gmra.mxu0 %v261
    %v485 = vpop.f32.mrf.mxu0
    %v486 = vadd.f32 %v309, %v485
    %v487 = vpop.f32.mrf.mxu0
    %v488 = vadd.f32 %v309, %v487
    %489 = vmatmul.bf16.gmra.mxu0 %v263
    %v490 = vpop.f32.mrf.mxu0
    %v491 = vadd.f32 %v309, %v490
    %v492 = vpop.f32.mrf.mxu0
    %v493 = vadd.f32 %v309, %v492
    %494 = vmatmul.bf16.gmra.mxu0 %v265
    %v495 = vpop.f32.mrf.mxu0
    %v496 = vadd.f32 %v309, %v495
    %v497 = vpop.f32.mrf.mxu0
    %v498 = vadd.f32 %v309, %v497
    %499 = vmatmul.bf16.gmra.mxu0 %v267
    %v500 = vpop.f32.mrf.mxu0
    %v501 = vadd.f32 %v309, %v500
    %v502 = vpop.f32.mrf.mxu0
    %v503 = vadd.f32 %v309, %v502
    %504 = vmatmul.bf16.gmra.mxu0 %v269
    %v505 = vpop.f32.mrf.mxu0
    %v506 = vadd.f32 %v309, %v505
    %v507 = vpop.f32.mrf.mxu0
    %v508 = vadd.f32 %v309, %v507
    %509 = vmatmul.bf16.gmra.mxu0 %v271
    %v510 = vpop.f32.mrf.mxu0
    %v511 = vadd.f32 %v309, %v510
    %v512 = vpop.f32.mrf.mxu0
    %v513 = vadd.f32 %v309, %v512
    %514 = vmatmul.bf16.gmra.mxu0 %v273
    %v515 = vpop.f32.mrf.mxu0
    %v516 = vadd.f32 %v309, %v515
    %v517 = vpop.f32.mrf.mxu0
    %v518 = vadd.f32 %v309, %v517
    %519 = vmatmul.bf16.gmra.mxu0 %v275
    %v520 = vpop.f32.mrf.mxu0
    %v521 = vadd.f32 %v309, %v520
    %v522 = vpop.f32.mrf.mxu0
    %v523 = vadd.f32 %v309, %v522
    %524 = vmatmul.bf16.gmra.mxu0 %v277
    %v525 = vpop.f32.mrf.mxu0
    %v526 = vadd.f32 %v309, %v525
    %v527 = vpop.f32.mrf.mxu0
    %v528 = vadd.f32 %v309, %v527
    %529 = vmatmul.bf16.gmra.mxu0 %v279
    %v530 = vpop.f32.mrf.mxu0
    %v531 = vadd.f32 %v309, %v530
    %v532 = vpop.f32.mrf.mxu0
    %v533 = vadd.f32 %v309, %v532
    %534 = vmatmul.bf16.gmra.mxu0 %v281
    %v535 = vpop.f32.mrf.mxu0
    %v536 = vadd.f32 %v309, %v535
    %v537 = vpop.f32.mrf.mxu0
    %v538 = vadd.f32 %v309, %v537
    %539 = vmatmul.bf16.gmra.mxu0 %v283
    %v540 = vpop.f32.mrf.mxu0
    %v541 = vadd.f32 %v309, %v540
    %v542 = vpop.f32.mrf.mxu0
    %v543 = vadd.f32 %v309, %v542
    %544 = vmatmul.bf16.gmra.mxu0 %v285
    %v545 = vpop.f32.mrf.mxu0
    %v546 = vadd.f32 %v309, %v545
    %v547 = vpop.f32.mrf.mxu0
    %v548 = vadd.f32 %v309, %v547
    %549 = vmatmul.bf16.gmra.mxu0 %v287
    %v550 = vpop.f32.mrf.mxu0
    %v551 = vadd.f32 %v309, %v550
    %v552 = vpop.f32.mrf.mxu0
    %v553 = vadd.f32 %v309, %v552
    %554 = vmatmul.bf16.gmra.mxu0 %v289
    %v555 = vpop.f32.mrf.mxu0
    %v556 = vadd.f32 %v309, %v555
    %v557 = vpop.f32.mrf.mxu0
    %v558 = vadd.f32 %v309, %v557
    %559 = vdwg.mxu0
    %560 = vmatpush.bf16.xpose.msra.mxu0 %v374
    %561 = vmatpush.bf16.xpose.msra.mxu0 %v372
    %562 = vmatpush.bf16.xpose.msra.mxu0 %v370
    %563 = vmatpush.bf16.xpose.msra.mxu0 %v368
    %564 = vmatpush.bf16.xpose.msra.mxu0 %v366
    %565 = vmatpush.bf16.xpose.msra.mxu0 %v364
    %566 = vmatpush.bf16.xpose.msra.mxu0 %v362
    %567 = vmatpush.bf16.xpose.msra.mxu0 %v360
    %568 = vmatmul.bf16.gmra.mxu0 %v228
    %v569 = vpop.f32.mrf.mxu0
    %v570 = vadd.f32 %v401, %v569
    %v571 = vpop.f32.mrf.mxu0
    %v572 = vadd.f32 %v403, %v571
    %573 = vmatmul.bf16.gmra.mxu0 %v230
    %v574 = vpop.f32.mrf.mxu0
    %v575 = vadd.f32 %v406, %v574
    %v576 = vpop.f32.mrf.mxu0
    %v577 = vadd.f32 %v408, %v576
    %578 = vmatmul.bf16.gmra.mxu0 %v232
    %v579 = vpop.f32.mrf.mxu0
    %v580 = vadd.f32 %v411, %v579
    %v581 = vpop.f32.mrf.mxu0
    %v582 = vadd.f32 %v413, %v581
    %583 = vmatmul.bf16.gmra.mxu0 %v234
    %v584 = vpop.f32.mrf.mxu0
    %v585 = vadd.f32 %v416, %v584
    %v586 = vpop.f32.mrf.mxu0
    %v587 = vadd.f32 %v418, %v586
    %588 = vmatmul.bf16.gmra.mxu0 %v236
    %v589 = vpop.f32.mrf.mxu0
    %v590 = vadd.f32 %v421, %v589
    %v591 = vpop.f32.mrf.mxu0
    %v592 = vadd.f32 %v423, %v591
    %593 = vmatmul.bf16.gmra.mxu0 %v238
    %v594 = vpop.f32.mrf.mxu0
    %v595 = vadd.f32 %v426, %v594
    %v596 = vpop.f32.mrf.mxu0
    %v597 = vadd.f32 %v428, %v596
    %598 = vmatmul.bf16.gmra.mxu0 %v240
    %v599 = vpop.f32.mrf.mxu0
    %v600 = vadd.f32 %v431, %v599
    %v601 = vpop.f32.mrf.mxu0
    %v602 = vadd.f32 %v433, %v601
    %603 = vmatmul.bf16.gmra.mxu0 %v242
    %v604 = vpop.f32.mrf.mxu0
    %v605 = vadd.f32 %v436, %v604
    %v606 = vpop.f32.mrf.mxu0
    %v607 = vadd.f32 %v438, %v606
    %608 = vmatmul.bf16.gmra.mxu0 %v244
    %v609 = vpop.f32.mrf.mxu0
    %v610 = vadd.f32 %v441, %v609
    %v611 = vpop.f32.mrf.mxu0
    %v612 = vadd.f32 %v443, %v611
    %613 = vmatmul.bf16.gmra.mxu0 %v246
    %v614 = vpop.f32.mrf.mxu0
    %v615 = vadd.f32 %v446, %v614
    %v616 = vpop.f32.mrf.mxu0
    %v617 = vadd.f32 %v448, %v616
    %618 = vmatmul.bf16.gmra.mxu0 %v248
    %v619 = vpop.f32.mrf.mxu0
    %v620 = vadd.f32 %v451, %v619
    %v621 = vpop.f32.mrf.mxu0
    %v622 = vadd.f32 %v453, %v621
    %623 = vmatmul.bf16.gmra.mxu0 %v250
    %v624 = vpop.f32.mrf.mxu0
    %v625 = vadd.f32 %v456, %v624
    %v626 = vpop.f32.mrf.mxu0
    %v627 = vadd.f32 %v458, %v626
    %628 = vmatmul.bf16.gmra.mxu0 %v252
    %v629 = vpop.f32.mrf.mxu0
    %v630 = vadd.f32 %v461, %v629
    %v631 = vpop.f32.mrf.mxu0
    %v632 = vadd.f32 %v463, %v631
    %633 = vmatmul.bf16.gmra.mxu0 %v254
    %v634 = vpop.f32.mrf.mxu0
    %v635 = vadd.f32 %v466, %v634
    %v636 = vpop.f32.mrf.mxu0
    %v637 = vadd.f32 %v468, %v636
    %638 = vmatmul.bf16.gmra.mxu0 %v256
    %v639 = vpop.f32.mrf.mxu0
    %v640 = vadd.f32 %v471, %v639
    %v641 = vpop.f32.mrf.mxu0
    %v642 = vadd.f32 %v473, %v641
    %643 = vmatmul.bf16.gmra.mxu0 %v258
    %v644 = vpop.f32.mrf.mxu0
    %v645 = vadd.f32 %v476, %v644
    %v646 = vpop.f32.mrf.mxu0
    %v647 = vadd.f32 %v478, %v646
    %648 = vmatmul.bf16.gmra.mxu0 %v260
    %v649 = vpop.f32.mrf.mxu0
    %v650 = vadd.f32 %v481, %v649
    %v651 = vpop.f32.mrf.mxu0
    %v652 = vadd.f32 %v483, %v651
    %653 = vmatmul.bf16.gmra.mxu0 %v262
    %v654 = vpop.f32.mrf.mxu0
    %v655 = vadd.f32 %v486, %v654
    %v656 = vpop.f32.mrf.mxu0
    %v657 = vadd.f32 %v488, %v656
    %658 = vmatmul.bf16.gmra.mxu0 %v264
    %v659 = vpop.f32.mrf.mxu0
    %v660 = vadd.f32 %v491, %v659
    %v661 = vpop.f32.mrf.mxu0
    %v662 = vadd.f32 %v493, %v661
    %663 = vmatmul.bf16.gmra.mxu0 %v266
    %v664 = vpop.f32.mrf.mxu0
    %v665 = vadd.f32 %v496, %v664
    %v666 = vpop.f32.mrf.mxu0
    %v667 = vadd.f32 %v498, %v666
    %668 = vmatmul.bf16.gmra.mxu0 %v268
    %v669 = vpop.f32.mrf.mxu0
    %v670 = vadd.f32 %v501, %v669
    %v671 = vpop.f32.mrf.mxu0
    %v672 = vadd.f32 %v503, %v671
    %673 = vmatmul.bf16.gmra.mxu0 %v270
    %v674 = vpop.f32.mrf.mxu0
    %v675 = vadd.f32 %v506, %v674
    %v676 = vpop.f32.mrf.mxu0
    %v677 = vadd.f32 %v508, %v676
    %678 = vmatmul.bf16.gmra.mxu0 %v272
    %v679 = vpop.f32.mrf.mxu0
    %v680 = vadd.f32 %v511, %v679
    %v681 = vpop.f32.mrf.mxu0
    %v682 = vadd.f32 %v513, %v681
    %683 = vmatmul.bf16.gmra.mxu0 %v274
    %v684 = vpop.f32.mrf.mxu0
    %v685 = vadd.f32 %v516, %v684
    %v686 = vpop.f32.mrf.mxu0
    %v687 = vadd.f32 %v518, %v686
    %688 = vmatmul.bf16.gmra.mxu0 %v276
    %v689 = vpop.f32.mrf.mxu0
    %v690 = vadd.f32 %v521, %v689
    %v691 = vpop.f32.mrf.mxu0
    %v692 = vadd.f32 %v523, %v691
    %693 = vmatmul.bf16.gmra.mxu0 %v278
    %v694 = vpop.f32.mrf.mxu0
    %v695 = vadd.f32 %v526, %v694
    %v696 = vpop.f32.mrf.mxu0
    %v697 = vadd.f32 %v528, %v696
    %698 = vmatmul.bf16.gmra.mxu0 %v280
    %v699 = vpop.f32.mrf.mxu0
    %v700 = vadd.f32 %v531, %v699
    %v701 = vpop.f32.mrf.mxu0
    %v702 = vadd.f32 %v533, %v701
    %703 = vmatmul.bf16.gmra.mxu0 %v282
    %v704 = vpop.f32.mrf.mxu0
    %v705 = vadd.f32 %v536, %v704
    %v706 = vpop.f32.mrf.mxu0
    %v707 = vadd.f32 %v538, %v706
    %708 = vmatmul.bf16.gmra.mxu0 %v284
    %v709 = vpop.f32.mrf.mxu0
    %v710 = vadd.f32 %v541, %v709
    %v711 = vpop.f32.mrf.mxu0
    %v712 = vadd.f32 %v543, %v711
    %713 = vmatmul.bf16.gmra.mxu0 %v286
    %v714 = vpop.f32.mrf.mxu0
    %v715 = vadd.f32 %v546, %v714
    %v716 = vpop.f32.mrf.mxu0
    %v717 = vadd.f32 %v548, %v716
    %718 = vmatmul.bf16.gmra.mxu0 %v288
    %v719 = vpop.f32.mrf.mxu0
    %v720 = vadd.f32 %v551, %v719
    %v721 = vpop.f32.mrf.mxu0
    %v722 = vadd.f32 %v553, %v721
    %723 = vmatmul.bf16.gmra.mxu0 %v290
    %v724 = vpop.f32.mrf.mxu0
    %v725 = vadd.f32 %v556, %v724
    %v726 = vpop.f32.mrf.mxu0
    %v727 = vadd.f32 %v558, %v726
    %728 = vdwg.mxu0
    %v729 = vld [vmem:[#allocation7] sm:$0xff]
    %v730 = vld [vmem:[#allocation7 + $0x8] sm:$0xff]
    %v731 = vld [vmem:[#allocation7 + $0x10] sm:$0xff]
    %v732 = vld [vmem:[#allocation7 + $0x18] sm:$0xff]
    %v733 = vld [vmem:[#allocation7 + $0x20] sm:$0xff]
    %v734 = vld [vmem:[#allocation7 + $0x28] sm:$0xff]
    %v735 = vld [vmem:[#allocation7 + $0x30] sm:$0xff]
    %v736 = vld [vmem:[#allocation7 + $0x38] sm:$0xff]
    %v737 = vld [vmem:[#allocation7 + $0x40] sm:$0xff]
    %v738 = vld [vmem:[#allocation7 + $0x48] sm:$0xff]
    %v739 = vld [vmem:[#allocation7 + $0x50] sm:$0xff]
    %v740 = vld [vmem:[#allocation7 + $0x58] sm:$0xff]
    %v741 = vld [vmem:[#allocation7 + $0x60] sm:$0xff]
    %v742 = vld [vmem:[#allocation7 + $0x68] sm:$0xff]
    %v743 = vld [vmem:[#allocation7 + $0x70] sm:$0xff]
    %v744 = vld [vmem:[#allocation7 + $0x78] sm:$0xff]
    %v745 = vld [vmem:[#allocation7 + $0x80] sm:$0xff]
    %v746 = vld [vmem:[#allocation7 + $0x88] sm:$0xff]
    %v747 = vld [vmem:[#allocation7 + $0x90] sm:$0xff]
    %v748 = vld [vmem:[#allocation7 + $0x98] sm:$0xff]
    %v749 = vld [vmem:[#allocation7 + $0xa0] sm:$0xff]
    %v750 = vld [vmem:[#allocation7 + $0xa8] sm:$0xff]
    %v751 = vld [vmem:[#allocation7 + $0xb0] sm:$0xff]
    %v752 = vld [vmem:[#allocation7 + $0xb8] sm:$0xff]
    %v753 = vld [vmem:[#allocation7 + $0xc0] sm:$0xff]
    %v754 = vld [vmem:[#allocation7 + $0xc8] sm:$0xff]
    %v755 = vld [vmem:[#allocation7 + $0xd0] sm:$0xff]
    %v756 = vld [vmem:[#allocation7 + $0xd8] sm:$0xff]
    %v757 = vld [vmem:[#allocation7 + $0xe0] sm:$0xff]
    %v758 = vld [vmem:[#allocation7 + $0xe8] sm:$0xff]
    %v759 = vld [vmem:[#allocation7 + $0xf0] sm:$0xff]
    %v760 = vld [vmem:[#allocation7 + $0xf8] sm:$0xff]
    %v761 = vld [vmem:[#allocation7 + $0x100] sm:$0xff]
    %v762 = vld [vmem:[#allocation7 + $0x108] sm:$0xff]
    %v763 = vld [vmem:[#allocation7 + $0x110] sm:$0xff]
    %v764 = vld [vmem:[#allocation7 + $0x118] sm:$0xff]
    %v765 = vld [vmem:[#allocation7 + $0x120] sm:$0xff]
    %v766 = vld [vmem:[#allocation7 + $0x128] sm:$0xff]
    %v767 = vld [vmem:[#allocation7 + $0x130] sm:$0xff]
    %v768 = vld [vmem:[#allocation7 + $0x138] sm:$0xff]
    %v769 = vld [vmem:[#allocation7 + $0x140] sm:$0xff]
    %v770 = vld [vmem:[#allocation7 + $0x148] sm:$0xff]
    %v771 = vld [vmem:[#allocation7 + $0x150] sm:$0xff]
    %v772 = vld [vmem:[#allocation7 + $0x158] sm:$0xff]
    %v773 = vld [vmem:[#allocation7 + $0x160] sm:$0xff]
    %v774 = vld [vmem:[#allocation7 + $0x168] sm:$0xff]
    %v775 = vld [vmem:[#allocation7 + $0x170] sm:$0xff]
    %v776 = vld [vmem:[#allocation7 + $0x178] sm:$0xff]
    %v777 = vld [vmem:[#allocation7 + $0x180] sm:$0xff]
    %v778 = vld [vmem:[#allocation7 + $0x188] sm:$0xff]
    %v779 = vld [vmem:[#allocation7 + $0x190] sm:$0xff]
    %v780 = vld [vmem:[#allocation7 + $0x198] sm:$0xff]
    %v781 = vld [vmem:[#allocation7 + $0x1a0] sm:$0xff]
    %v782 = vld [vmem:[#allocation7 + $0x1a8] sm:$0xff]
    %v783 = vld [vmem:[#allocation7 + $0x1b0] sm:$0xff]
    %v784 = vld [vmem:[#allocation7 + $0x1b8] sm:$0xff]
    %v785 = vld [vmem:[#allocation7 + $0x1c0] sm:$0xff]
    %v786 = vld [vmem:[#allocation7 + $0x1c8] sm:$0xff]
    %v787 = vld [vmem:[#allocation7 + $0x1d0] sm:$0xff]
    %v788 = vld [vmem:[#allocation7 + $0x1d8] sm:$0xff]
    %v789 = vld [vmem:[#allocation7 + $0x1e0] sm:$0xff]
    %v790 = vld [vmem:[#allocation7 + $0x1e8] sm:$0xff]
    %v791 = vld [vmem:[#allocation7 + $0x1f0] sm:$0xff]
    %v792 = vld [vmem:[#allocation7 + $0x1f8] sm:$0xff]
    %v793 = vsub.f32 %v570, %v729
    %v794 = vsub.f32 %v572, %v730
    %v795 = vsub.f32 %v575, %v731
    %v796 = vsub.f32 %v577, %v732
    %v797 = vsub.f32 %v580, %v733
    %v798 = vsub.f32 %v582, %v734
    %v799 = vsub.f32 %v585, %v735
    %v800 = vsub.f32 %v587, %v736
    %v801 = vsub.f32 %v590, %v737
    %v802 = vsub.f32 %v592, %v738
    %v803 = vsub.f32 %v595, %v739
    %v804 = vsub.f32 %v597, %v740
    %v805 = vsub.f32 %v600, %v741
    %v806 = vsub.f32 %v602, %v742
    %v807 = vsub.f32 %v605, %v743
    %v808 = vsub.f32 %v607, %v744
    %v809 = vsub.f32 %v610, %v745
    %v810 = vsub.f32 %v612, %v746
    %v811 = vsub.f32 %v615, %v747
    %v812 = vsub.f32 %v617, %v748
    %v813 = vsub.f32 %v620, %v749
    %v814 = vsub.f32 %v622, %v750
    %v815 = vsub.f32 %v625, %v751
    %v816 = vsub.f32 %v627, %v752
    %v817 = vsub.f32 %v630, %v753
    %v818 = vsub.f32 %v632, %v754
    %v819 = vsub.f32 %v635, %v755
    %v820 = vsub.f32 %v637, %v756
    %v821 = vsub.f32 %v640, %v757
    %v822 = vsub.f32 %v642, %v758
    %v823 = vsub.f32 %v645, %v759
    %v824 = vsub.f32 %v647, %v760
    %v825 = vsub.f32 %v650, %v761
    %v826 = vsub.f32 %v652, %v762
    %v827 = vsub.f32 %v655, %v763
    %v828 = vsub.f32 %v657, %v764
    %v829 = vsub.f32 %v660, %v765
    %v830 = vsub.f32 %v662, %v766
    %v831 = vsub.f32 %v665, %v767
    %v832 = vsub.f32 %v667, %v768
    %v833 = vsub.f32 %v670, %v769
    %v834 = vsub.f32 %v672, %v770
    %v835 = vsub.f32 %v675, %v771
    %v836 = vsub.f32 %v677, %v772
    %v837 = vsub.f32 %v680, %v773
    %v838 = vsub.f32 %v682, %v774
    %v839 = vsub.f32 %v685, %v775
    %v840 = vsub.f32 %v687, %v776
    %v841 = vsub.f32 %v690, %v777
    %v842 = vsub.f32 %v692, %v778
    %v843 = vsub.f32 %v695, %v779
    %v844 = vsub.f32 %v697, %v780
    %v845 = vsub.f32 %v700, %v781
    %v846 = vsub.f32 %v702, %v782
    %v847 = vsub.f32 %v705, %v783
    %v848 = vsub.f32 %v707, %v784
    %v849 = vsub.f32 %v710, %v785
    %v850 = vsub.f32 %v712, %v786
    %v851 = vsub.f32 %v715, %v787
    %v852 = vsub.f32 %v717, %v788
    %v853 = vsub.f32 %v720, %v789
    %v854 = vsub.f32 %v722, %v790
    %v855 = vsub.f32 %v725, %v791
    %v856 = vsub.f32 %v727, %v792
    %v857 = vmul.f32 %v793, %v793
    %v858 = vmul.f32 %v794, %v794
    %v859 = vmul.f32 %v795, %v795
    %v860 = vmul.f32 %v796, %v796
    %v861 = vmul.f32 %v797, %v797
    %v862 = vmul.f32 %v798, %v798
    %v863 = vmul.f32 %v799, %v799
    %v864 = vmul.f32 %v800, %v800
    %v865 = vmul.f32 %v801, %v801
    %v866 = vmul.f32 %v802, %v802
    %v867 = vmul.f32 %v803, %v803
    %v868 = vmul.f32 %v804, %v804
    %v869 = vmul.f32 %v805, %v805
    %v870 = vmul.f32 %v806, %v806
    %v871 = vmul.f32 %v807, %v807
    %v872 = vmul.f32 %v808, %v808
    %v873 = vmul.f32 %v809, %v809
    %v874 = vmul.f32 %v810, %v810
    %v875 = vmul.f32 %v811, %v811
    %v876 = vmul.f32 %v812, %v812
    %v877 = vmul.f32 %v813, %v813
    %v878 = vmul.f32 %v814, %v814
    %v879 = vmul.f32 %v815, %v815
    %v880 = vmul.f32 %v816, %v816
    %v881 = vmul.f32 %v817, %v817
    %v882 = vmul.f32 %v818, %v818
    %v883 = vmul.f32 %v819, %v819
    %v884 = vmul.f32 %v820, %v820
    %v885 = vmul.f32 %v821, %v821
    %v886 = vmul.f32 %v822, %v822
    %v887 = vmul.f32 %v823, %v823
    %v888 = vmul.f32 %v824, %v824
    %v889 = vmul.f32 %v825, %v825
    %v890 = vmul.f32 %v826, %v826
    %v891 = vmul.f32 %v827, %v827
    %v892 = vmul.f32 %v828, %v828
    %v893 = vmul.f32 %v829, %v829
    %v894 = vmul.f32 %v830, %v830
    %v895 = vmul.f32 %v831, %v831
    %v896 = vmul.f32 %v832, %v832
    %v897 = vmul.f32 %v833, %v833
    %v898 = vmul.f32 %v834, %v834
    %v899 = vmul.f32 %v835, %v835
    %v900 = vmul.f32 %v836, %v836
    %v901 = vmul.f32 %v837, %v837
    %v902 = vmul.f32 %v838, %v838
    %v903 = vmul.f32 %v839, %v839
    %v904 = vmul.f32 %v840, %v840
    %v905 = vmul.f32 %v841, %v841
    %v906 = vmul.f32 %v842, %v842
    %v907 = vmul.f32 %v843, %v843
    %v908 = vmul.f32 %v844, %v844
    %v909 = vmul.f32 %v845, %v845
    %v910 = vmul.f32 %v846, %v846
    %v911 = vmul.f32 %v847, %v847
    %v912 = vmul.f32 %v848, %v848
    %v913 = vmul.f32 %v849, %v849
    %v914 = vmul.f32 %v850, %v850
    %v915 = vmul.f32 %v851, %v851
    %v916 = vmul.f32 %v852, %v852
    %v917 = vmul.f32 %v853, %v853
    %v918 = vmul.f32 %v854, %v854
    %v919 = vmul.f32 %v855, %v855
    %v920 = vmul.f32 %v856, %v856
    %s921 = sadd.s32 0, 0
    %s922 = smul.u32 %s921, 512
    %s923 = sadd.s32 %s922, 512
    %p924 = scmp.gt.s32.totalorder %s923, 500
    // Predicated region
    $region34: #{tpu_custom_call.1} parent=1 // pred_check
      %p925 = pneg %p924
    $region35: #{tpu_custom_call.1} parent=1 // pred_check_branch
      %927 = sbr.rel (%p925) target = $region37
    $region36: #{tpu_custom_call.1} parent=1 // pred_region
      %v928 = vlaneseq
      %v929 = vshrl.u32 %v928, 7
      %v930 = vadd.s32 %v929, 8
      %v931 = vadd.s32 %v929, 16
      %v932 = vadd.s32 %v929, 24
      %v933 = vadd.s32 %v929, 32
      %v934 = vadd.s32 %v929, 40
      %v935 = vadd.s32 %v929, 48
      %v936 = vadd.s32 %v929, 56
      %v937 = vadd.s32 %v929, 64
      %v938 = vadd.s32 %v929, 72
      %v939 = vadd.s32 %v929, 80
      %v940 = vadd.s32 %v929, 88
      %v941 = vadd.s32 %v929, 96
      %v942 = vadd.s32 %v929, 104
      %v943 = vadd.s32 %v929, 112
      %v944 = vadd.s32 %v929, 120
      %v945 = vadd.s32 %v929, 128
      %v946 = vadd.s32 %v929, 136
      %v947 = vadd.s32 %v929, 144
      %v948 = vadd.s32 %v929, 152
      %v949 = vadd.s32 %v929, 160
      %v950 = vadd.s32 %v929, 168
      %v951 = vadd.s32 %v929, 176
      %v952 = vadd.s32 %v929, 184
      %v953 = vadd.s32 %v929, 192
      %v954 = vadd.s32 %v929, 200
      %v955 = vadd.s32 %v929, 208
      %v956 = vadd.s32 %v929, 216
      %v957 = vadd.s32 %v929, 224
      %v958 = vadd.s32 %v929, 232
      %v959 = vadd.s32 %v929, 240
      %v960 = vadd.s32 %v929, 248
      %v961 = vadd.s32 %v929, 256
      %v962 = vadd.s32 %v929, 264
      %v963 = vadd.s32 %v929, 272
      %v964 = vadd.s32 %v929, 280
      %v965 = vadd.s32 %v929, 288
      %v966 = vadd.s32 %v929, 296
      %v967 = vadd.s32 %v929, 304
      %v968 = vadd.s32 %v929, 312
      %v969 = vadd.s32 %v929, 320
      %v970 = vadd.s32 %v929, 328
      %v971 = vadd.s32 %v929, 336
      %v972 = vadd.s32 %v929, 344
      %v973 = vadd.s32 %v929, 352
      %v974 = vadd.s32 %v929, 360
      %v975 = vadd.s32 %v929, 368
      %v976 = vadd.s32 %v929, 376
      %v977 = vadd.s32 %v929, 384
      %v978 = vadd.s32 %v929, 392
      %v979 = vadd.s32 %v929, 400
      %v980 = vadd.s32 %v929, 408
      %v981 = vadd.s32 %v929, 416
      %v982 = vadd.s32 %v929, 424
      %v983 = vadd.s32 %v929, 432
      %v984 = vadd.s32 %v929, 440
      %v985 = vadd.s32 %v929, 448
      %v986 = vadd.s32 %v929, 456
      %v987 = vadd.s32 %v929, 464
      %v988 = vadd.s32 %v929, 472
      %v989 = vadd.s32 %v929, 480
      %v990 = vadd.s32 %v929, 488
      %v991 = vadd.s32 %v929, 496
      %v992 = vadd.s32 %v929, 504
      %v993 = vstv %s922
      %v994 = vadd.s32 %v993, %v929
      %v995 = vadd.s32 %v993, %v930
      %v996 = vadd.s32 %v993, %v931
      %v997 = vadd.s32 %v993, %v932
      %v998 = vadd.s32 %v993, %v933
      %v999 = vadd.s32 %v993, %v934
      %v1000 = vadd.s32 %v993, %v935
      %v1001 = vadd.s32 %v993, %v936
      %v1002 = vadd.s32 %v993, %v937
      %v1003 = vadd.s32 %v993, %v938
      %v1004 = vadd.s32 %v993, %v939
      %v1005 = vadd.s32 %v993, %v940
      %v1006 = vadd.s32 %v993, %v941
      %v1007 = vadd.s32 %v993, %v942
      %v1008 = vadd.s32 %v993, %v943
      %v1009 = vadd.s32 %v993, %v944
      %v1010 = vadd.s32 %v993, %v945
      %v1011 = vadd.s32 %v993, %v946
      %v1012 = vadd.s32 %v993, %v947
      %v1013 = vadd.s32 %v993, %v948
      %v1014 = vadd.s32 %v993, %v949
      %v1015 = vadd.s32 %v993, %v950
      %v1016 = vadd.s32 %v993, %v951
      %v1017 = vadd.s32 %v993, %v952
      %v1018 = vadd.s32 %v993, %v953
      %v1019 = vadd.s32 %v993, %v954
      %v1020 = vadd.s32 %v993, %v955
      %v1021 = vadd.s32 %v993, %v956
      %v1022 = vadd.s32 %v993, %v957
      %v1023 = vadd.s32 %v993, %v958
      %v1024 = vadd.s32 %v993, %v959
      %v1025 = vadd.s32 %v993, %v960
      %v1026 = vadd.s32 %v993, %v961
      %v1027 = vadd.s32 %v993, %v962
      %v1028 = vadd.s32 %v993, %v963
      %v1029 = vadd.s32 %v993, %v964
      %v1030 = vadd.s32 %v993, %v965
      %v1031 = vadd.s32 %v993, %v966
      %v1032 = vadd.s32 %v993, %v967
      %v1033 = vadd.s32 %v993, %v968
      %v1034 = vadd.s32 %v993, %v969
      %v1035 = vadd.s32 %v993, %v970
      %v1036 = vadd.s32 %v993, %v971
      %v1037 = vadd.s32 %v993, %v972
      %v1038 = vadd.s32 %v993, %v973
      %v1039 = vadd.s32 %v993, %v974
      %v1040 = vadd.s32 %v993, %v975
      %v1041 = vadd.s32 %v993, %v976
      %v1042 = vadd.s32 %v993, %v977
      %v1043 = vadd.s32 %v993, %v978
      %v1044 = vadd.s32 %v993, %v979
      %v1045 = vadd.s32 %v993, %v980
      %v1046 = vadd.s32 %v993, %v981
      %v1047 = vadd.s32 %v993, %v982
      %v1048 = vadd.s32 %v993, %v983
      %v1049 = vadd.s32 %v993, %v984
      %v1050 = vadd.s32 %v993, %v985
      %v1051 = vadd.s32 %v993, %v986
      %v1052 = vadd.s32 %v993, %v987
      %v1053 = vadd.s32 %v993, %v988
      %v1054 = vadd.s32 %v993, %v989
      %v1055 = vadd.s32 %v993, %v990
      %v1056 = vadd.s32 %v993, %v991
      %v1057 = vadd.s32 %v993, %v992
      %vm1058 = vcmp.lt.s32.totalorder %v994, 500
      %vm1059 = vcmp.lt.s32.totalorder %v995, 500
      %vm1060 = vcmp.lt.s32.totalorder %v996, 500
      %vm1061 = vcmp.lt.s32.totalorder %v997, 500
      %vm1062 = vcmp.lt.s32.totalorder %v998, 500
      %vm1063 = vcmp.lt.s32.totalorder %v999, 500
      %vm1064 = vcmp.lt.s32.totalorder %v1000, 500
      %vm1065 = vcmp.lt.s32.totalorder %v1001, 500
      %vm1066 = vcmp.lt.s32.totalorder %v1002, 500
      %vm1067 = vcmp.lt.s32.totalorder %v1003, 500
      %vm1068 = vcmp.lt.s32.totalorder %v1004, 500
      %vm1069 = vcmp.lt.s32.totalorder %v1005, 500
      %vm1070 = vcmp.lt.s32.totalorder %v1006, 500
      %vm1071 = vcmp.lt.s32.totalorder %v1007, 500
      %vm1072 = vcmp.lt.s32.totalorder %v1008, 500
      %vm1073 = vcmp.lt.s32.totalorder %v1009, 500
      %vm1074 = vcmp.lt.s32.totalorder %v1010, 500
      %vm1075 = vcmp.lt.s32.totalorder %v1011, 500
      %vm1076 = vcmp.lt.s32.totalorder %v1012, 500
      %vm1077 = vcmp.lt.s32.totalorder %v1013, 500
      %vm1078 = vcmp.lt.s32.totalorder %v1014, 500
      %vm1079 = vcmp.lt.s32.totalorder %v1015, 500
      %vm1080 = vcmp.lt.s32.totalorder %v1016, 500
      %vm1081 = vcmp.lt.s32.totalorder %v1017, 500
      %vm1082 = vcmp.lt.s32.totalorder %v1018, 500
      %vm1083 = vcmp.lt.s32.totalorder %v1019, 500
      %vm1084 = vcmp.lt.s32.totalorder %v1020, 500
      %vm1085 = vcmp.lt.s32.totalorder %v1021, 500
      %vm1086 = vcmp.lt.s32.totalorder %v1022, 500
      %vm1087 = vcmp.lt.s32.totalorder %v1023, 500
      %vm1088 = vcmp.lt.s32.totalorder %v1024, 500
      %vm1089 = vcmp.lt.s32.totalorder %v1025, 500
      %vm1090 = vcmp.lt.s32.totalorder %v1026, 500
      %vm1091 = vcmp.lt.s32.totalorder %v1027, 500
      %vm1092 = vcmp.lt.s32.totalorder %v1028, 500
      %vm1093 = vcmp.lt.s32.totalorder %v1029, 500
      %vm1094 = vcmp.lt.s32.totalorder %v1030, 500
      %vm1095 = vcmp.lt.s32.totalorder %v1031, 500
      %vm1096 = vcmp.lt.s32.totalorder %v1032, 500
      %vm1097 = vcmp.lt.s32.totalorder %v1033, 500
      %vm1098 = vcmp.lt.s32.totalorder %v1034, 500
      %vm1099 = vcmp.lt.s32.totalorder %v1035, 500
      %vm1100 = vcmp.lt.s32.totalorder %v1036, 500
      %vm1101 = vcmp.lt.s32.totalorder %v1037, 500
      %vm1102 = vcmp.lt.s32.totalorder %v1038, 500
      %vm1103 = vcmp.lt.s32.totalorder %v1039, 500
      %vm1104 = vcmp.lt.s32.totalorder %v1040, 500
      %vm1105 = vcmp.lt.s32.totalorder %v1041, 500
      %vm1106 = vcmp.lt.s32.totalorder %v1042, 500
      %vm1107 = vcmp.lt.s32.totalorder %v1043, 500
      %vm1108 = vcmp.lt.s32.totalorder %v1044, 500
      %vm1109 = vcmp.lt.s32.totalorder %v1045, 500
      %vm1110 = vcmp.lt.s32.totalorder %v1046, 500
      %vm1111 = vcmp.lt.s32.totalorder %v1047, 500
      %vm1112 = vcmp.lt.s32.totalorder %v1048, 500
      %vm1113 = vcmp.lt.s32.totalorder %v1049, 500
      %vm1114 = vcmp.lt.s32.totalorder %v1050, 500
      %vm1115 = vcmp.lt.s32.totalorder %v1051, 500
      %vm1116 = vcmp.lt.s32.totalorder %v1052, 500
      %vm1117 = vcmp.lt.s32.totalorder %v1053, 500
      %vm1118 = vcmp.lt.s32.totalorder %v1054, 500
      %vm1119 = vcmp.lt.s32.totalorder %v1055, 500
      %vm1120 = vcmp.lt.s32.totalorder %v1056, 500
      %vm1121 = vcmp.lt.s32.totalorder %v1057, 500
      %v1122 = vsel %vm1058, 1, 0
      %v1123 = vsel %vm1059, 1, 0
      %v1124 = vsel %vm1060, 1, 0
      %v1125 = vsel %vm1061, 1, 0
      %v1126 = vsel %vm1062, 1, 0
      %v1127 = vsel %vm1063, 1, 0
      %v1128 = vsel %vm1064, 1, 0
      %v1129 = vsel %vm1065, 1, 0
      %v1130 = vsel %vm1066, 1, 0
      %v1131 = vsel %vm1067, 1, 0
      %v1132 = vsel %vm1068, 1, 0
      %v1133 = vsel %vm1069, 1, 0
      %v1134 = vsel %vm1070, 1, 0
      %v1135 = vsel %vm1071, 1, 0
      %v1136 = vsel %vm1072, 1, 0
      %v1137 = vsel %vm1073, 1, 0
      %v1138 = vsel %vm1074, 1, 0
      %v1139 = vsel %vm1075, 1, 0
      %v1140 = vsel %vm1076, 1, 0
      %v1141 = vsel %vm1077, 1, 0
      %v1142 = vsel %vm1078, 1, 0
      %v1143 = vsel %vm1079, 1, 0
      %v1144 = vsel %vm1080, 1, 0
      %v1145 = vsel %vm1081, 1, 0
      %v1146 = vsel %vm1082, 1, 0
      %v1147 = vsel %vm1083, 1, 0
      %v1148 = vsel %vm1084, 1, 0
      %v1149 = vsel %vm1085, 1, 0
      %v1150 = vsel %vm1086, 1, 0
      %v1151 = vsel %vm1087, 1, 0
      %v1152 = vsel %vm1088, 1, 0
      %v1153 = vsel %vm1089, 1, 0
      %v1154 = vsel %vm1090, 1, 0
      %v1155 = vsel %vm1091, 1, 0
      %v1156 = vsel %vm1092, 1, 0
      %v1157 = vsel %vm1093, 1, 0
      %v1158 = vsel %vm1094, 1, 0
      %v1159 = vsel %vm1095, 1, 0
      %v1160 = vsel %vm1096, 1, 0
      %v1161 = vsel %vm1097, 1, 0
      %v1162 = vsel %vm1098, 1, 0
      %v1163 = vsel %vm1099, 1, 0
      %v1164 = vsel %vm1100, 1, 0
      %v1165 = vsel %vm1101, 1, 0
      %v1166 = vsel %vm1102, 1, 0
      %v1167 = vsel %vm1103, 1, 0
      %v1168 = vsel %vm1104, 1, 0
      %v1169 = vsel %vm1105, 1, 0
      %v1170 = vsel %vm1106, 1, 0
      %v1171 = vsel %vm1107, 1, 0
      %v1172 = vsel %vm1108, 1, 0
      %v1173 = vsel %vm1109, 1, 0
      %v1174 = vsel %vm1110, 1, 0
      %v1175 = vsel %vm1111, 1, 0
      %v1176 = vsel %vm1112, 1, 0
      %v1177 = vsel %vm1113, 1, 0
      %v1178 = vsel %vm1114, 1, 0
      %v1179 = vsel %vm1115, 1, 0
      %v1180 = vsel %vm1116, 1, 0
      %v1181 = vsel %vm1117, 1, 0
      %v1182 = vsel %vm1118, 1, 0
      %v1183 = vsel %vm1119, 1, 0
      %v1184 = vsel %vm1120, 1, 0
      %v1185 = vsel %vm1121, 1, 0
      %vm1186 = vcmp.eq.s32.totalorder %v1122, 1
      %vm1187 = vcmp.eq.s32.totalorder %v1123, 1
      %vm1188 = vcmp.eq.s32.totalorder %v1124, 1
      %vm1189 = vcmp.eq.s32.totalorder %v1125, 1
      %vm1190 = vcmp.eq.s32.totalorder %v1126, 1
      %vm1191 = vcmp.eq.s32.totalorder %v1127, 1
      %vm1192 = vcmp.eq.s32.totalorder %v1128, 1
      %vm1193 = vcmp.eq.s32.totalorder %v1129, 1
      %vm1194 = vcmp.eq.s32.totalorder %v1130, 1
      %vm1195 = vcmp.eq.s32.totalorder %v1131, 1
      %vm1196 = vcmp.eq.s32.totalorder %v1132, 1
      %vm1197 = vcmp.eq.s32.totalorder %v1133, 1
      %vm1198 = vcmp.eq.s32.totalorder %v1134, 1
      %vm1199 = vcmp.eq.s32.totalorder %v1135, 1
      %vm1200 = vcmp.eq.s32.totalorder %v1136, 1
      %vm1201 = vcmp.eq.s32.totalorder %v1137, 1
      %vm1202 = vcmp.eq.s32.totalorder %v1138, 1
      %vm1203 = vcmp.eq.s32.totalorder %v1139, 1
      %vm1204 = vcmp.eq.s32.totalorder %v1140, 1
      %vm1205 = vcmp.eq.s32.totalorder %v1141, 1
      %vm1206 = vcmp.eq.s32.totalorder %v1142, 1
      %vm1207 = vcmp.eq.s32.totalorder %v1143, 1
      %vm1208 = vcmp.eq.s32.totalorder %v1144, 1
      %vm1209 = vcmp.eq.s32.totalorder %v1145, 1
      %vm1210 = vcmp.eq.s32.totalorder %v1146, 1
      %vm1211 = vcmp.eq.s32.totalorder %v1147, 1
      %vm1212 = vcmp.eq.s32.totalorder %v1148, 1
      %vm1213 = vcmp.eq.s32.totalorder %v1149, 1
      %vm1214 = vcmp.eq.s32.totalorder %v1150, 1
      %vm1215 = vcmp.eq.s32.totalorder %v1151, 1
      %vm1216 = vcmp.eq.s32.totalorder %v1152, 1
      %vm1217 = vcmp.eq.s32.totalorder %v1153, 1
      %vm1218 = vcmp.eq.s32.totalorder %v1154, 1
      %vm1219 = vcmp.eq.s32.totalorder %v1155, 1
      %vm1220 = vcmp.eq.s32.totalorder %v1156, 1
      %vm1221 = vcmp.eq.s32.totalorder %v1157, 1
      %vm1222 = vcmp.eq.s32.totalorder %v1158, 1
      %vm1223 = vcmp.eq.s32.totalorder %v1159, 1
      %vm1224 = vcmp.eq.s32.totalorder %v1160, 1
      %vm1225 = vcmp.eq.s32.totalorder %v1161, 1
      %vm1226 = vcmp.eq.s32.totalorder %v1162, 1
      %vm1227 = vcmp.eq.s32.totalorder %v1163, 1
      %vm1228 = vcmp.eq.s32.totalorder %v1164, 1
      %vm1229 = vcmp.eq.s32.totalorder %v1165, 1
      %vm1230 = vcmp.eq.s32.totalorder %v1166, 1
      %vm1231 = vcmp.eq.s32.totalorder %v1167, 1
      %vm1232 = vcmp.eq.s32.totalorder %v1168, 1
      %vm1233 = vcmp.eq.s32.totalorder %v1169, 1
      %vm1234 = vcmp.eq.s32.totalorder %v1170, 1
      %vm1235 = vcmp.eq.s32.totalorder %v1171, 1
      %vm1236 = vcmp.eq.s32.totalorder %v1172, 1
      %vm1237 = vcmp.eq.s32.totalorder %v1173, 1
      %vm1238 = vcmp.eq.s32.totalorder %v1174, 1
      %vm1239 = vcmp.eq.s32.totalorder %v1175, 1
      %vm1240 = vcmp.eq.s32.totalorder %v1176, 1
      %vm1241 = vcmp.eq.s32.totalorder %v1177, 1
      %vm1242 = vcmp.eq.s32.totalorder %v1178, 1
      %vm1243 = vcmp.eq.s32.totalorder %v1179, 1
      %vm1244 = vcmp.eq.s32.totalorder %v1180, 1
      %vm1245 = vcmp.eq.s32.totalorder %v1181, 1
      %vm1246 = vcmp.eq.s32.totalorder %v1182, 1
      %vm1247 = vcmp.eq.s32.totalorder %v1183, 1
      %vm1248 = vcmp.eq.s32.totalorder %v1184, 1
      %vm1249 = vcmp.eq.s32.totalorder %v1185, 1
      %v1250 = vsel %vm1186, %v857, 0.0
      %v1251 = vsel %vm1187, %v858, 0.0
      %v1252 = vsel %vm1188, %v859, 0.0
      %v1253 = vsel %vm1189, %v860, 0.0
      %v1254 = vsel %vm1190, %v861, 0.0
      %v1255 = vsel %vm1191, %v862, 0.0
      %v1256 = vsel %vm1192, %v863, 0.0
      %v1257 = vsel %vm1193, %v864, 0.0
      %v1258 = vsel %vm1194, %v865, 0.0
      %v1259 = vsel %vm1195, %v866, 0.0
      %v1260 = vsel %vm1196, %v867, 0.0
      %v1261 = vsel %vm1197, %v868, 0.0
      %v1262 = vsel %vm1198, %v869, 0.0
      %v1263 = vsel %vm1199, %v870, 0.0
      %v1264 = vsel %vm1200, %v871, 0.0
      %v1265 = vsel %vm1201, %v872, 0.0
      %v1266 = vsel %vm1202, %v873, 0.0
      %v1267 = vsel %vm1203, %v874, 0.0
      %v1268 = vsel %vm1204, %v875, 0.0
      %v1269 = vsel %vm1205, %v876, 0.0
      %v1270 = vsel %vm1206, %v877, 0.0
      %v1271 = vsel %vm1207, %v878, 0.0
      %v1272 = vsel %vm1208, %v879, 0.0
      %v1273 = vsel %vm1209, %v880, 0.0
      %v1274 = vsel %vm1210, %v881, 0.0
      %v1275 = vsel %vm1211, %v882, 0.0
      %v1276 = vsel %vm1212, %v883, 0.0
      %v1277 = vsel %vm1213, %v884, 0.0
      %v1278 = vsel %vm1214, %v885, 0.0
      %v1279 = vsel %vm1215, %v886, 0.0
      %v1280 = vsel %vm1216, %v887, 0.0
      %v1281 = vsel %vm1217, %v888, 0.0
      %v1282 = vsel %vm1218, %v889, 0.0
      %v1283 = vsel %vm1219, %v890, 0.0
      %v1284 = vsel %vm1220, %v891, 0.0
      %v1285 = vsel %vm1221, %v892, 0.0
      %v1286 = vsel %vm1222, %v893, 0.0
      %v1287 = vsel %vm1223, %v894, 0.0
      %v1288 = vsel %vm1224, %v895, 0.0
      %v1289 = vsel %vm1225, %v896, 0.0
      %v1290 = vsel %vm1226, %v897, 0.0
      %v1291 = vsel %vm1227, %v898, 0.0
      %v1292 = vsel %vm1228, %v899, 0.0
      %v1293 = vsel %vm1229, %v900, 0.0
      %v1294 = vsel %vm1230, %v901, 0.0
      %v1295 = vsel %vm1231, %v902, 0.0
      %v1296 = vsel %vm1232, %v903, 0.0
      %v1297 = vsel %vm1233, %v904, 0.0
      %v1298 = vsel %vm1234, %v905, 0.0
      %v1299 = vsel %vm1235, %v906, 0.0
      %v1300 = vsel %vm1236, %v907, 0.0
      %v1301 = vsel %vm1237, %v908, 0.0
      %v1302 = vsel %vm1238, %v909, 0.0
      %v1303 = vsel %vm1239, %v910, 0.0
      %v1304 = vsel %vm1240, %v911, 0.0
      %v1305 = vsel %vm1241, %v912, 0.0
      %v1306 = vsel %vm1242, %v913, 0.0
      %v1307 = vsel %vm1243, %v914, 0.0
      %v1308 = vsel %vm1244, %v915, 0.0
      %v1309 = vsel %vm1245, %v916, 0.0
      %v1310 = vsel %vm1246, %v917, 0.0
      %v1311 = vsel %vm1247, %v918, 0.0
      %v1312 = vsel %vm1248, %v919, 0.0
      %v1313 = vsel %vm1249, %v920, 0.0
      %v1314 = vld [vmem:[#allocation8] sm:$0xff]
      %v1315 = vadd.f32 %v1250, %v1251
      %v1316 = vadd.f32 %v1315, %v1252
      %v1317 = vadd.f32 %v1316, %v1253
      %v1318 = vadd.f32 %v1317, %v1254
      %v1319 = vadd.f32 %v1318, %v1255
      %v1320 = vadd.f32 %v1319, %v1256
      %v1321 = vadd.f32 %v1320, %v1257
      %v1322 = vadd.f32 %v1321, %v1258
      %v1323 = vadd.f32 %v1322, %v1259
      %v1324 = vadd.f32 %v1323, %v1260
      %v1325 = vadd.f32 %v1324, %v1261
      %v1326 = vadd.f32 %v1325, %v1262
      %v1327 = vadd.f32 %v1326, %v1263
      %v1328 = vadd.f32 %v1327, %v1264
      %v1329 = vadd.f32 %v1328, %v1265
      %v1330 = vadd.f32 %v1329, %v1266
      %v1331 = vadd.f32 %v1330, %v1267
      %v1332 = vadd.f32 %v1331, %v1268
      %v1333 = vadd.f32 %v1332, %v1269
      %v1334 = vadd.f32 %v1333, %v1270
      %v1335 = vadd.f32 %v1334, %v1271
      %v1336 = vadd.f32 %v1335, %v1272
      %v1337 = vadd.f32 %v1336, %v1273
      %v1338 = vadd.f32 %v1337, %v1274
      %v1339 = vadd.f32 %v1338, %v1275
      %v1340 = vadd.f32 %v1339, %v1276
      %v1341 = vadd.f32 %v1340, %v1277
      %v1342 = vadd.f32 %v1341, %v1278
      %v1343 = vadd.f32 %v1342, %v1279
      %v1344 = vadd.f32 %v1343, %v1280
      %v1345 = vadd.f32 %v1344, %v1281
      %v1346 = vadd.f32 %v1345, %v1282
      %v1347 = vadd.f32 %v1346, %v1283
      %v1348 = vadd.f32 %v1347, %v1284
      %v1349 = vadd.f32 %v1348, %v1285
      %v1350 = vadd.f32 %v1349, %v1286
      %v1351 = vadd.f32 %v1350, %v1287
      %v1352 = vadd.f32 %v1351, %v1288
      %v1353 = vadd.f32 %v1352, %v1289
      %v1354 = vadd.f32 %v1353, %v1290
      %v1355 = vadd.f32 %v1354, %v1291
      %v1356 = vadd.f32 %v1355, %v1292
      %v1357 = vadd.f32 %v1356, %v1293
      %v1358 = vadd.f32 %v1357, %v1294
      %v1359 = vadd.f32 %v1358, %v1295
      %v1360 = vadd.f32 %v1359, %v1296
      %v1361 = vadd.f32 %v1360, %v1297
      %v1362 = vadd.f32 %v1361, %v1298
      %v1363 = vadd.f32 %v1362, %v1299
      %v1364 = vadd.f32 %v1363, %v1300
      %v1365 = vadd.f32 %v1364, %v1301
      %v1366 = vadd.f32 %v1365, %v1302
      %v1367 = vadd.f32 %v1366, %v1303
      %v1368 = vadd.f32 %v1367, %v1304
      %v1369 = vadd.f32 %v1368, %v1305
      %v1370 = vadd.f32 %v1369, %v1306
      %v1371 = vadd.f32 %v1370, %v1307
      %v1372 = vadd.f32 %v1371, %v1308
      %v1373 = vadd.f32 %v1372, %v1309
      %v1374 = vadd.f32 %v1373, %v1310
      %v1375 = vadd.f32 %v1374, %v1311
      %v1376 = vadd.f32 %v1375, %v1312
      %v1377 = vadd.f32 %v1376, %v1313
      %v1378 = vadd.f32 %v1314, %v1377
      %1379 = vst [vmem:[#allocation8] sm:$0xff] %v1378
    $region37: #{tpu_custom_call.1} parent=1 // pred_fallthru
      _
    %p1380 = scmp.le.s32.totalorder %s923, 500
    // Predicated region
    $region38: #{tpu_custom_call.1} parent=1 // pred_check
      %p1381 = pneg %p1380
    $region39: #{tpu_custom_call.1} parent=1 // pred_check_branch
      %1383 = sbr.rel (%p1381) target = $region41
    $region40: #{tpu_custom_call.1} parent=1 // pred_region
      %v1384 = vld [vmem:[#allocation8] sm:$0xff]
      %v1385 = vadd.f32 %v857, %v858
      %v1386 = vadd.f32 %v1385, %v859
      %v1387 = vadd.f32 %v1386, %v860
      %v1388 = vadd.f32 %v1387, %v861
      %v1389 = vadd.f32 %v1388, %v862
      %v1390 = vadd.f32 %v1389, %v863
      %v1391 = vadd.f32 %v1390, %v864
      %v1392 = vadd.f32 %v1391, %v865
      %v1393 = vadd.f32 %v1392, %v866
      %v1394 = vadd.f32 %v1393, %v867
      %v1395 = vadd.f32 %v1394, %v868
      %v1396 = vadd.f32 %v1395, %v869
      %v1397 = vadd.f32 %v1396, %v870
      %v1398 = vadd.f32 %v1397, %v871
      %v1399 = vadd.f32 %v1398, %v872
      %v1400 = vadd.f32 %v1399, %v873
      %v1401 = vadd.f32 %v1400, %v874
      %v1402 = vadd.f32 %v1401, %v875
      %v1403 = vadd.f32 %v1402, %v876
      %v1404 = vadd.f32 %v1403, %v877
      %v1405 = vadd.f32 %v1404, %v878
      %v1406 = vadd.f32 %v1405, %v879
      %v1407 = vadd.f32 %v1406, %v880
      %v1408 = vadd.f32 %v1407, %v881
      %v1409 = vadd.f32 %v1408, %v882
      %v1410 = vadd.f32 %v1409, %v883
      %v1411 = vadd.f32 %v1410, %v884
      %v1412 = vadd.f32 %v1411, %v885
      %v1413 = vadd.f32 %v1412, %v886
      %v1414 = vadd.f32 %v1413, %v887
      %v1415 = vadd.f32 %v1414, %v888
      %v1416 = vadd.f32 %v1415, %v889
      %v1417 = vadd.f32 %v1416, %v890
      %v1418 = vadd.f32 %v1417, %v891
      %v1419 = vadd.f32 %v1418, %v892
      %v1420 = vadd.f32 %v1419, %v893
      %v1421 = vadd.f32 %v1420, %v894
      %v1422 = vadd.f32 %v1421, %v895
      %v1423 = vadd.f32 %v1422, %v896
      %v1424 = vadd.f32 %v1423, %v897
      %v1425 = vadd.f32 %v1424, %v898
      %v1426 = vadd.f32 %v1425, %v899
      %v1427 = vadd.f32 %v1426, %v900
      %v1428 = vadd.f32 %v1427, %v901
      %v1429 = vadd.f32 %v1428, %v902
      %v1430 = vadd.f32 %v1429, %v903
      %v1431 = vadd.f32 %v1430, %v904
      %v1432 = vadd.f32 %v1431, %v905
      %v1433 = vadd.f32 %v1432, %v906
      %v1434 = vadd.f32 %v1433, %v907
      %v1435 = vadd.f32 %v1434, %v908
      %v1436 = vadd.f32 %v1435, %v909
      %v1437 = vadd.f32 %v1436, %v910
      %v1438 = vadd.f32 %v1437, %v911
      %v1439 = vadd.f32 %v1438, %v912
      %v1440 = vadd.f32 %v1439, %v913
      %v1441 = vadd.f32 %v1440, %v914
      %v1442 = vadd.f32 %v1441, %v915
      %v1443 = vadd.f32 %v1442, %v916
      %v1444 = vadd.f32 %v1443, %v917
      %v1445 = vadd.f32 %v1444, %v918
      %v1446 = vadd.f32 %v1445, %v919
      %v1447 = vadd.f32 %v1446, %v920
      %v1448 = vadd.f32 %v1384, %v1447
      %1449 = vst [vmem:[#allocation8] sm:$0xff] %v1448
    $region41: #{tpu_custom_call.1} parent=1 // pred_fallthru
      _
    // Predicated region
    $region42: #{tpu_custom_call.1} parent=1 // pred_check
      _
    $region43: #{tpu_custom_call.1} parent=1 // pred_check_branch
      %1451 = sbr.rel (0) target = $region45
    $region44: #{tpu_custom_call.1} parent=1 // pred_region
      %1453 = vsyncadd [#allocation4], 0
      %s1455 = sshll.u32 [#allocation8], 4
      %s1456 = int_to_ptr.vmem [resolvable:$true] %s1455
      %s1457 = sshll.u32 %s4, 4
      %s1458 = int_to_ptr.hbm [resolvable:$true] %s1457
      %1460 = dma.vmem_to_hbm [thread:$0]  %s1456, 128, %s1458, [#allocation4]
    $region45: #{tpu_custom_call.1} parent=1 // pred_fallthru
      _
    // Predicated region
    $region46: #{tpu_custom_call.1} parent=1 // pred_check
      _
    $region47: #{tpu_custom_call.1} parent=1 // pred_check_branch
      %1462 = sbr.rel (0) target = $region49
    $region48: #{tpu_custom_call.1} parent=1 // pred_region
      %1464 = dma.done [#allocation4], 128
    $region49: #{tpu_custom_call.1} parent=1 // pred_fallthru
      _
    %1465 = vsyncpa [#allocation3], 1
    %1466 = vsyncpa [#allocation6], 1
    %1467 = vsyncpa [#allocation4], 1

</llo_original>
